<compile_context>
chip_gen: v5e
topology: v5e:2x2
jax: 0.10.0
libtpu: 0.0.40
codegen_flags: <defaults>
</compile_context>

<pallas_src>
import functools

import jax
import jax.numpy as jnp
from jax.experimental import pallas as pl
from jax.experimental.pallas import tpu as pltpu


def _round_up(x, m):
    return ((x + m - 1) // m) * m


def _autoencoder_kernel(x_ref,
                        w1, b1, w2, b2, w3, b3,   # encoder linears
                        w4, b4, w5, b5, w6, b6,   # decoder linears
                        o_ref):
    """Whole MLP chain fused per batch tile.  x_ref: (TB, 784) f32."""
    # Layer 1 (784 -> 128): cast the streamed f32 rows to bf16 in-register and
    # run bf16 x bf16 on the MXU with f32 accumulation.
    x_bf = x_ref[...].astype(jnp.bfloat16)
    h = jnp.dot(x_bf, w1[...], preferred_element_type=jnp.float32) + b1[...]
    h = jnp.maximum(h, 0.0)

    def linear_relu(h, w_ref, b_ref):
        y = jnp.dot(h, w_ref[...], preferred_element_type=jnp.float32) + b_ref[...]
        return jnp.maximum(y, 0.0)

    # Small middle layers (128->64->32->64->128), kept in f32 (negligible FLOPs).
    h = linear_relu(h, w2, b2)
    h = linear_relu(h, w3, b3)
    h = linear_relu(h, w4, b4)
    h = linear_relu(h, w5, b5)

    # Output layer (128 -> 784): bf16 MXU, f32 accumulate, sigmoid, f32 store.
    logits = (jnp.dot(h.astype(jnp.bfloat16), w6[...],
                      preferred_element_type=jnp.float32) + b6[...])
    o_ref[...] = jax.nn.sigmoid(logits).astype(o_ref.dtype)


def init_params(key, encoding_dims=(128, 64, 32), input_channels=1,
                input_size=(28, 28)):
    """Parameter init matching the PyTorch module's layer shapes.

    Returns a flat list [w1, b1, ..., w6, b6] with weights stored as
    (in_features, out_features).  The first and last (784-dim) weights are
    stored in bf16 for the MXU; no padding is applied to any parameter.
    """
    in_features = input_channels * input_size[0] * input_size[1]

    # Encoder layer dims: 784->128->64->32
    dims = [in_features] + list(encoding_dims)
    layer_shapes = list(zip(dims[:-1], dims[1:]))
    # Decoder layer dims: 32->64->128->784  (encoding_dims[1::-1] == [64, 128])
    dec_dims = [encoding_dims[-1]] + list(encoding_dims[1::-1]) + [in_features]
    layer_shapes += list(zip(dec_dims[:-1], dec_dims[1:]))

    params = []
    n_layers = len(layer_shapes)
    for li, (fan_in, fan_out) in enumerate(layer_shapes):
        key, wk, bk = jax.random.split(key, 3)
        bound = 1.0 / float(fan_in) ** 0.5
        w = jax.random.uniform(wk, (fan_in, fan_out), jnp.float32, -bound, bound)
        b = jax.random.uniform(bk, (1, fan_out), jnp.float32, -bound, bound)
        if li == 0 or li == n_layers - 1:
            w = w.astype(jnp.bfloat16)   # the two big layers run bf16 on the MXU
        params.extend([w, b])
    return params


@functools.partial(jax.jit,
                   static_argnames=("input_channels", "input_size", "block_rows"))
def deep_autoencoder_forward(x, params, *, input_channels=1,
                             input_size=(28, 28), block_rows=1024):
    """x: (B, C, H, W) float32, NCHW.  Returns (B, C, H, W) float32."""
    b = x.shape[0]
    in_features = input_channels * input_size[0] * input_size[1]

    # Batch tile: multiple of 16 (bf16 sublane packing of in-kernel activations),
    # capped by block_rows.  block_rows=1024 fits v6e/v7x default scoped VMEM;
    # on v5e use 512 or raise vmem_limit_bytes.
    tb = min(block_rows, _round_up(b, 16))
    # Keep >= 2 grid steps when the batch allows it, so the "parallel" batch
    # axis can shard across both v7x TensorCores.
    if b <= tb and b >= 32:
        tb = _round_up((b + 1) // 2, 16)
    b_pad = _round_up(b, tb)

    x_flat = x.reshape(b, in_features)               # torch x.view(B, -1), no copy
    if b_pad != b:
        x_flat = jnp.pad(x_flat, ((0, b_pad - b), (0, 0)))

    grid = (b_pad // tb,)
    in_spec = pl.BlockSpec((tb, in_features), lambda i: (i, 0))
    out_spec = pl.BlockSpec((tb, in_features), lambda i: (i, 0))
    # Full-array, constant-index blocks -> weights stay VMEM-resident across steps.
    param_specs = [pl.BlockSpec(p.shape, lambda i: (0, 0)) for p in params]

    flops = 2 * b_pad * sum(int(w.shape[0]) * int(w.shape[1])
                            for w in params[0::2])
    bytes_accessed = (int(x_flat.size) * 4 + b_pad * in_features * 4
                      + sum(int(p.size) * p.dtype.itemsize for p in params))
    cost = pl.CostEstimate(flops=flops,
                           transcendentals=2 * b_pad * in_features,
                           bytes_accessed=bytes_accessed)

    out_flat = pl.pallas_call(
        _autoencoder_kernel,
        out_shape=jax.ShapeDtypeStruct((b_pad, in_features), jnp.float32),
        grid=grid,
        in_specs=[in_spec] + param_specs,
        out_specs=out_spec,
        compiler_params=pltpu.CompilerParams(
            dimension_semantics=("parallel",)),
        cost_estimate=cost,
    )(x_flat, *params)

    if b_pad != b:
        out_flat = out_flat[:b]
    return out_flat.reshape(b, input_channels, input_size[0], input_size[1])


def _reference_forward(x, params, input_channels=1, input_size=(28, 28)):
    """Pure-JAX reference mirroring the kernel's bf16 casts on the big layers."""
    b = x.shape[0]
    in_features = input_channels * input_size[0] * input_size[1]
    h = x.reshape(b, in_features).astype(jnp.float32)
    n_layers = len(params) // 2
    for i in range(n_layers):
        w = params[2 * i]
        bias = params[2 * i + 1].astype(jnp.float32)
        if w.dtype == jnp.bfloat16:
            h = h.astype(jnp.bfloat16).astype(jnp.float32)
        h = h @ w.astype(jnp.float32) + bias
        if i < n_layers - 1:
            h = jnp.maximum(h, 0.0)
        else:
            h = jax.nn.sigmoid(h)
    return h.reshape(b, input_channels, input_size[0], input_size[1])


if __name__ == "__main__":
    key = jax.random.PRNGKey(0)
    pkey, xkey = jax.random.split(key)

    input_channels = 1
    input_size = (28, 28)
    batch = 2

    params = init_params(pkey, encoding_dims=(128, 64, 32),
                         input_channels=input_channels, input_size=input_size)

    x = jax.random.uniform(xkey, (batch, input_channels, *input_size),
                           dtype=jnp.float32)

    out = deep_autoencoder_forward(x, params,
                                   input_channels=input_channels,
                                   input_size=input_size)
    out = jax.block_until_ready(out)

    ref = _reference_forward(x, params, input_channels, input_size)
    assert out.shape == (batch, input_channels, *input_size)
    # bf16 MXU path on the two large layers -> loosened tolerance vs f32 math.
    assert jnp.allclose(out, ref, atol=2e-2, rtol=2e-2), "mismatch vs reference"

    print("KERNEL_OK")
</pallas_src>

<mosaic_0001>
module attributes {stable_mosaic.version = 11 : i64} {
  func.func @_autoencoder_kernel(%arg0: i32, %arg1: memref<16x784xf32, #tpu.memory_space<vmem>>, %arg2: memref<784x128xbf16, #tpu.memory_space<vmem>>, %arg3: memref<1x128xf32, #tpu.memory_space<vmem>>, %arg4: memref<128x64xf32, #tpu.memory_space<vmem>>, %arg5: memref<1x64xf32, #tpu.memory_space<vmem>>, %arg6: memref<64x32xf32, #tpu.memory_space<vmem>>, %arg7: memref<1x32xf32, #tpu.memory_space<vmem>>, %arg8: memref<32x64xf32, #tpu.memory_space<vmem>>, %arg9: memref<1x64xf32, #tpu.memory_space<vmem>>, %arg10: memref<64x128xf32, #tpu.memory_space<vmem>>, %arg11: memref<1x128xf32, #tpu.memory_space<vmem>>, %arg12: memref<128x784xbf16, #tpu.memory_space<vmem>>, %arg13: memref<1x784xf32, #tpu.memory_space<vmem>>, %arg14: memref<16x784xf32, #tpu.memory_space<vmem>>) attributes {dimension_semantics = [#tpu.dimension_semantics<parallel>], iteration_bounds = array<i64: 1>, scalar_prefetch = 0 : i64, scratch_operands = 0 : i64, tpu.core_type = #tpu.core_type<tc>, window_params = [{transform_indices = @transform_0, window_bounds = array<i64: 16, 784>}, {pipeline_mode = #tpu.pipeline_mode<synchronous>, transform_indices = @transform_1, window_bounds = array<i64: 784, 128>}, {pipeline_mode = #tpu.pipeline_mode<synchronous>, transform_indices = @transform_2, window_bounds = array<i64: 1, 128>}, {pipeline_mode = #tpu.pipeline_mode<synchronous>, transform_indices = @transform_3, window_bounds = array<i64: 128, 64>}, {pipeline_mode = #tpu.pipeline_mode<synchronous>, transform_indices = @transform_4, window_bounds = array<i64: 1, 64>}, {pipeline_mode = #tpu.pipeline_mode<synchronous>, transform_indices = @transform_5, window_bounds = array<i64: 64, 32>}, {pipeline_mode = #tpu.pipeline_mode<synchronous>, transform_indices = @transform_6, window_bounds = array<i64: 1, 32>}, {pipeline_mode = #tpu.pipeline_mode<synchronous>, transform_indices = @transform_7, window_bounds = array<i64: 32, 64>}, {pipeline_mode = #tpu.pipeline_mode<synchronous>, transform_indices = @transform_8, window_bounds = array<i64: 1, 64>}, {pipeline_mode = #tpu.pipeline_mode<synchronous>, transform_indices = @transform_9, window_bounds = array<i64: 64, 128>}, {pipeline_mode = #tpu.pipeline_mode<synchronous>, transform_indices = @transform_10, window_bounds = array<i64: 1, 128>}, {pipeline_mode = #tpu.pipeline_mode<synchronous>, transform_indices = @transform_11, window_bounds = array<i64: 128, 784>}, {pipeline_mode = #tpu.pipeline_mode<synchronous>, transform_indices = @transform_12, window_bounds = array<i64: 1, 784>}, {transform_indices = @transform_13, window_bounds = array<i64: 16, 784>}]} {
    %c0 = arith.constant 0 : index
    %c0_0 = arith.constant 0 : index
    %0 = vector.load %arg1[%c0, %c0_0] : memref<16x784xf32, #tpu.memory_space<vmem>>, vector<16x784xf32>
    %1 = arith.truncf %0 : vector<16x784xf32> to vector<16x784xbf16>
    %c0_1 = arith.constant 0 : index
    %c0_2 = arith.constant 0 : index
    %2 = vector.load %arg2[%c0_1, %c0_2] : memref<784x128xbf16, #tpu.memory_space<vmem>>, vector<784x128xbf16>
    %cst = arith.constant dense<0.000000e+00> : vector<16x128xf32>
    %3 = tpu.matmul %1, %2, %cst {dimension_numbers = #tpu.dot_dimension_numbers<[1], [0], [0], [1], [0, 0, 1, 1], [], []>} : vector<16x784xbf16>, vector<784x128xbf16>, vector<16x128xf32> -> vector<16x128xf32>
    %c0_3 = arith.constant 0 : index
    %c0_4 = arith.constant 0 : index
    %4 = vector.load %arg3[%c0_3, %c0_4] : memref<1x128xf32, #tpu.memory_space<vmem>>, vector<1x128xf32>
    %5 = vector.broadcast %4 : vector<1x128xf32> to vector<16x128xf32>
    %6 = arith.addf %3, %5 : vector<16x128xf32>
    %cst_5 = arith.constant 0.000000e+00 : f32
    %7 = vector.broadcast %cst_5 : f32 to vector<16x128xf32>
    %8 = arith.maximumf %6, %7 : vector<16x128xf32>
    %c0_6 = arith.constant 0 : index
    %c0_7 = arith.constant 0 : index
    %9 = vector.load %arg4[%c0_6, %c0_7] : memref<128x64xf32, #tpu.memory_space<vmem>>, vector<128x64xf32>
    %cst_8 = arith.constant dense<0.000000e+00> : vector<16x64xf32>
    %10 = tpu.matmul %8, %9, %cst_8 {dimension_numbers = #tpu.dot_dimension_numbers<[1], [0], [0], [1], [0, 0, 1, 1], [], []>} : vector<16x128xf32>, vector<128x64xf32>, vector<16x64xf32> -> vector<16x64xf32>
    %c0_9 = arith.constant 0 : index
    %c0_10 = arith.constant 0 : index
    %11 = vector.load %arg5[%c0_9, %c0_10] : memref<1x64xf32, #tpu.memory_space<vmem>>, vector<1x64xf32>
    %12 = vector.broadcast %11 : vector<1x64xf32> to vector<16x64xf32>
    %13 = arith.addf %10, %12 : vector<16x64xf32>
    %cst_11 = arith.constant 0.000000e+00 : f32
    %14 = vector.broadcast %cst_11 : f32 to vector<16x64xf32>
    %15 = arith.maximumf %13, %14 : vector<16x64xf32>
    %c0_12 = arith.constant 0 : index
    %c0_13 = arith.constant 0 : index
    %16 = vector.load %arg6[%c0_12, %c0_13] : memref<64x32xf32, #tpu.memory_space<vmem>>, vector<64x32xf32>
    %cst_14 = arith.constant dense<0.000000e+00> : vector<16x32xf32>
    %17 = tpu.matmul %15, %16, %cst_14 {dimension_numbers = #tpu.dot_dimension_numbers<[1], [0], [0], [1], [0, 0, 1, 1], [], []>} : vector<16x64xf32>, vector<64x32xf32>, vector<16x32xf32> -> vector<16x32xf32>
    %c0_15 = arith.constant 0 : index
    %c0_16 = arith.constant 0 : index
    %18 = vector.load %arg7[%c0_15, %c0_16] : memref<1x32xf32, #tpu.memory_space<vmem>>, vector<1x32xf32>
    %19 = vector.broadcast %18 : vector<1x32xf32> to vector<16x32xf32>
    %20 = arith.addf %17, %19 : vector<16x32xf32>
    %cst_17 = arith.constant 0.000000e+00 : f32
    %21 = vector.broadcast %cst_17 : f32 to vector<16x32xf32>
    %22 = arith.maximumf %20, %21 : vector<16x32xf32>
    %c0_18 = arith.constant 0 : index
    %c0_19 = arith.constant 0 : index
    %23 = vector.load %arg8[%c0_18, %c0_19] : memref<32x64xf32, #tpu.memory_space<vmem>>, vector<32x64xf32>
    %cst_20 = arith.constant dense<0.000000e+00> : vector<16x64xf32>
    %24 = tpu.matmul %22, %23, %cst_20 {dimension_numbers = #tpu.dot_dimension_numbers<[1], [0], [0], [1], [0, 0, 1, 1], [], []>} : vector<16x32xf32>, vector<32x64xf32>, vector<16x64xf32> -> vector<16x64xf32>
    %c0_21 = arith.constant 0 : index
    %c0_22 = arith.constant 0 : index
    %25 = vector.load %arg9[%c0_21, %c0_22] : memref<1x64xf32, #tpu.memory_space<vmem>>, vector<1x64xf32>
    %26 = vector.broadcast %25 : vector<1x64xf32> to vector<16x64xf32>
    %27 = arith.addf %24, %26 : vector<16x64xf32>
    %cst_23 = arith.constant 0.000000e+00 : f32
    %28 = vector.broadcast %cst_23 : f32 to vector<16x64xf32>
    %29 = arith.maximumf %27, %28 : vector<16x64xf32>
    %c0_24 = arith.constant 0 : index
    %c0_25 = arith.constant 0 : index
    %30 = vector.load %arg10[%c0_24, %c0_25] : memref<64x128xf32, #tpu.memory_space<vmem>>, vector<64x128xf32>
    %cst_26 = arith.constant dense<0.000000e+00> : vector<16x128xf32>
    %31 = tpu.matmul %29, %30, %cst_26 {dimension_numbers = #tpu.dot_dimension_numbers<[1], [0], [0], [1], [0, 0, 1, 1], [], []>} : vector<16x64xf32>, vector<64x128xf32>, vector<16x128xf32> -> vector<16x128xf32>
    %c0_27 = arith.constant 0 : index
    %c0_28 = arith.constant 0 : index
    %32 = vector.load %arg11[%c0_27, %c0_28] : memref<1x128xf32, #tpu.memory_space<vmem>>, vector<1x128xf32>
    %33 = vector.broadcast %32 : vector<1x128xf32> to vector<16x128xf32>
    %34 = arith.addf %31, %33 : vector<16x128xf32>
    %cst_29 = arith.constant 0.000000e+00 : f32
    %35 = vector.broadcast %cst_29 : f32 to vector<16x128xf32>
    %36 = arith.maximumf %34, %35 : vector<16x128xf32>
    %37 = arith.truncf %36 : vector<16x128xf32> to vector<16x128xbf16>
    %c0_30 = arith.constant 0 : index
    %c0_31 = arith.constant 0 : index
    %38 = vector.load %arg12[%c0_30, %c0_31] : memref<128x784xbf16, #tpu.memory_space<vmem>>, vector<128x784xbf16>
    %cst_32 = arith.constant dense<0.000000e+00> : vector<16x784xf32>
    %39 = tpu.matmul %37, %38, %cst_32 {dimension_numbers = #tpu.dot_dimension_numbers<[1], [0], [0], [1], [0, 0, 1, 1], [], []>} : vector<16x128xbf16>, vector<128x784xbf16>, vector<16x784xf32> -> vector<16x784xf32>
    %c0_33 = arith.constant 0 : index
    %c0_34 = arith.constant 0 : index
    %40 = vector.load %arg13[%c0_33, %c0_34] : memref<1x784xf32, #tpu.memory_space<vmem>>, vector<1x784xf32>
    %41 = vector.broadcast %40 : vector<1x784xf32> to vector<16x784xf32>
    %42 = arith.addf %39, %41 : vector<16x784xf32>
    %43 = arith.negf %42 : vector<16x784xf32>
    %44 = math.exp %43 : vector<16x784xf32>
    %cst_35 = arith.constant 1.000000e+00 : f32
    %45 = vector.broadcast %cst_35 : f32 to vector<16x784xf32>
    %46 = arith.addf %45, %44 : vector<16x784xf32>
    %47 = arith.divf %45, %46 : vector<16x784xf32>
    %c0_36 = arith.constant 0 : index
    %c0_37 = arith.constant 0 : index
    %48 = vector.load %arg14[%c0_36, %c0_37] : memref<16x784xf32, #tpu.memory_space<vmem>>, vector<16x784xf32>
    tpu.vector_store %arg14[%c0_36, %c0_37], %47 {strides = array<i32>} : memref<16x784xf32, #tpu.memory_space<vmem>>, vector<16x784xf32>,
    return
  }
  func.func @transform_0(%arg0: i32) -> (i32, i32) {
    %c0_i32 = arith.constant 0 : i32
    %c0_i32_0 = arith.constant 0 : i32
    return %arg0, %c0_i32 : i32, i32
  }
  func.func @transform_1(%arg0: i32) -> (i32, i32) {
    %c0_i32 = arith.constant 0 : i32
    %c0_i32_0 = arith.constant 0 : i32
    %c0_i32_1 = arith.constant 0 : i32
    return %c0_i32, %c0_i32_0 : i32, i32
  }
  func.func @transform_2(%arg0: i32) -> (i32, i32) {
    %c0_i32 = arith.constant 0 : i32
    %c0_i32_0 = arith.constant 0 : i32
    %c0_i32_1 = arith.constant 0 : i32
    return %c0_i32, %c0_i32_0 : i32, i32
  }
  func.func @transform_3(%arg0: i32) -> (i32, i32) {
    %c0_i32 = arith.constant 0 : i32
    %c0_i32_0 = arith.constant 0 : i32
    %c0_i32_1 = arith.constant 0 : i32
    return %c0_i32, %c0_i32_0 : i32, i32
  }
  func.func @transform_4(%arg0: i32) -> (i32, i32) {
    %c0_i32 = arith.constant 0 : i32
    %c0_i32_0 = arith.constant 0 : i32
    %c0_i32_1 = arith.constant 0 : i32
    return %c0_i32, %c0_i32_0 : i32, i32
  }
  func.func @transform_5(%arg0: i32) -> (i32, i32) {
    %c0_i32 = arith.constant 0 : i32
    %c0_i32_0 = arith.constant 0 : i32
    %c0_i32_1 = arith.constant 0 : i32
    return %c0_i32, %c0_i32_0 : i32, i32
  }
  func.func @transform_6(%arg0: i32) -> (i32, i32) {
    %c0_i32 = arith.constant 0 : i32
    %c0_i32_0 = arith.constant 0 : i32
    %c0_i32_1 = arith.constant 0 : i32
    return %c0_i32, %c0_i32_0 : i32, i32
  }
  func.func @transform_7(%arg0: i32) -> (i32, i32) {
    %c0_i32 = arith.constant 0 : i32
    %c0_i32_0 = arith.constant 0 : i32
    %c0_i32_1 = arith.constant 0 : i32
    return %c0_i32, %c0_i32_0 : i32, i32
  }
  func.func @transform_8(%arg0: i32) -> (i32, i32) {
    %c0_i32 = arith.constant 0 : i32
    %c0_i32_0 = arith.constant 0 : i32
    %c0_i32_1 = arith.constant 0 : i32
    return %c0_i32, %c0_i32_0 : i32, i32
  }
  func.func @transform_9(%arg0: i32) -> (i32, i32) {
    %c0_i32 = arith.constant 0 : i32
    %c0_i32_0 = arith.constant 0 : i32
    %c0_i32_1 = arith.constant 0 : i32
    return %c0_i32, %c0_i32_0 : i32, i32
  }
  func.func @transform_10(%arg0: i32) -> (i32, i32) {
    %c0_i32 = arith.constant 0 : i32
    %c0_i32_0 = arith.constant 0 : i32
    %c0_i32_1 = arith.constant 0 : i32
    return %c0_i32, %c0_i32_0 : i32, i32
  }
  func.func @transform_11(%arg0: i32) -> (i32, i32) {
    %c0_i32 = arith.constant 0 : i32
    %c0_i32_0 = arith.constant 0 : i32
    %c0_i32_1 = arith.constant 0 : i32
    return %c0_i32, %c0_i32_0 : i32, i32
  }
  func.func @transform_12(%arg0: i32) -> (i32, i32) {
    %c0_i32 = arith.constant 0 : i32
    %c0_i32_0 = arith.constant 0 : i32
    %c0_i32_1 = arith.constant 0 : i32
    return %c0_i32, %c0_i32_0 : i32, i32
  }
  func.func @transform_13(%arg0: i32) -> (i32, i32) {
    %c0_i32 = arith.constant 0 : i32
    %c0_i32_0 = arith.constant 0 : i32
    return %arg0, %c0_i32 : i32, i32
  }
}

</mosaic_0001>

<llo_original>
// kernel: deep_autoencoder_forward.1
$region0: #{deep_autoencoder_forward.1}
  #allocation0 [shape = 'u32[]', space=smem, size = 0x4, offset = 0x4, fixed_abs, tag = 'smem constant byte address 0x4 - core index']
  #allocation1 [shape = 'u32[72,128]{1,0:T(1,128)}', space=vmem, size = 0x9000, scoped, tag = 'internal scratch']
  %s0 = inlined_call_operand.vmem [shape: f32[16,784], index: 0, kind: input, shape index: {}]
  %s1 = inlined_call_operand.vmem [shape: bf16[784,128], index: 1, kind: input, shape index: {}]
  %s2 = inlined_call_operand.vmem [shape: f32[1,128], index: 2, kind: input, shape index: {}]
  %s3 = inlined_call_operand.vmem [shape: f32[128,64], index: 3, kind: input, shape index: {}]
  %s4 = inlined_call_operand.vmem [shape: f32[1,64], index: 4, kind: input, shape index: {}]
  %s5 = inlined_call_operand.vmem [shape: f32[64,32], index: 5, kind: input, shape index: {}]
  %s6 = inlined_call_operand.vmem [shape: f32[1,32], index: 6, kind: input, shape index: {}]
  %s7 = inlined_call_operand.vmem [shape: f32[32,64], index: 7, kind: input, shape index: {}]
  %s8 = inlined_call_operand.vmem [shape: f32[1,64], index: 8, kind: input, shape index: {}]
  %s9 = inlined_call_operand.vmem [shape: f32[64,128], index: 9, kind: input, shape index: {}]
  %s10 = inlined_call_operand.vmem [shape: f32[1,128], index: 10, kind: input, shape index: {}]
  %s11 = inlined_call_operand.vmem [shape: bf16[128,784], index: 11, kind: input, shape index: {}]
  %s12 = inlined_call_operand.vmem [shape: f32[1,784], index: 12, kind: input, shape index: {}]
  %s13 = inlined_call_operand.vmem [shape: f32[16,784], index: 13, kind: output, shape index: {}]
  %s14 = sld [smem:[#allocation0]]
  $region62: #{deep_autoencoder_forward.1} parent=0
    _
  %s16 = ssub.s32 1, %s14
  %s17 = scalar_select 0, %s16, %s14
  // Predicated region
  $region2: #{deep_autoencoder_forward.1} parent=0 // pred_check
    _
  $region3: #{deep_autoencoder_forward.1} parent=0 // pred_check_branch
    %19 = sbr.rel (0) target = $region5
  $region4: #{deep_autoencoder_forward.1} parent=0 // pred_region
    _
  $region5: #{deep_autoencoder_forward.1} parent=0 // pred_fallthru
    _
  // Predicated region
  $region6: #{deep_autoencoder_forward.1} parent=0 // pred_check
    _
  $region7: #{deep_autoencoder_forward.1} parent=0 // pred_check_branch
    %21 = sbr.rel (0) target = $region9
  $region8: #{deep_autoencoder_forward.1} parent=0 // pred_region
    _
  $region9: #{deep_autoencoder_forward.1} parent=0 // pred_fallthru
    _
  // Predicated region
  $region10: #{deep_autoencoder_forward.1} parent=0 // pred_check
    _
  $region11: #{deep_autoencoder_forward.1} parent=0 // pred_check_branch
    %23 = sbr.rel (0) target = $region13
  $region12: #{deep_autoencoder_forward.1} parent=0 // pred_region
    _
  $region13: #{deep_autoencoder_forward.1} parent=0 // pred_fallthru
    _
  // Predicated region
  $region14: #{deep_autoencoder_forward.1} parent=0 // pred_check
    _
  $region15: #{deep_autoencoder_forward.1} parent=0 // pred_check_branch
    %25 = sbr.rel (0) target = $region17
  $region16: #{deep_autoencoder_forward.1} parent=0 // pred_region
    _
  $region17: #{deep_autoencoder_forward.1} parent=0 // pred_fallthru
    _
  // Predicated region
  $region18: #{deep_autoencoder_forward.1} parent=0 // pred_check
    _
  $region19: #{deep_autoencoder_forward.1} parent=0 // pred_check_branch
    %27 = sbr.rel (0) target = $region21
  $region20: #{deep_autoencoder_forward.1} parent=0 // pred_region
    _
  $region21: #{deep_autoencoder_forward.1} parent=0 // pred_fallthru
    _
  // Predicated region
  $region22: #{deep_autoencoder_forward.1} parent=0 // pred_check
    _
  $region23: #{deep_autoencoder_forward.1} parent=0 // pred_check_branch
    %29 = sbr.rel (0) target = $region25
  $region24: #{deep_autoencoder_forward.1} parent=0 // pred_region
    _
  $region25: #{deep_autoencoder_forward.1} parent=0 // pred_fallthru
    _
  // Predicated region
  $region26: #{deep_autoencoder_forward.1} parent=0 // pred_check
    _
  $region27: #{deep_autoencoder_forward.1} parent=0 // pred_check_branch
    %31 = sbr.rel (0) target = $region29
  $region28: #{deep_autoencoder_forward.1} parent=0 // pred_region
    _
  $region29: #{deep_autoencoder_forward.1} parent=0 // pred_fallthru
    _
  // Predicated region
  $region30: #{deep_autoencoder_forward.1} parent=0 // pred_check
    _
  $region31: #{deep_autoencoder_forward.1} parent=0 // pred_check_branch
    %33 = sbr.rel (0) target = $region33
  $region32: #{deep_autoencoder_forward.1} parent=0 // pred_region
    _
  $region33: #{deep_autoencoder_forward.1} parent=0 // pred_fallthru
    _
  // Predicated region
  $region34: #{deep_autoencoder_forward.1} parent=0 // pred_check
    _
  $region35: #{deep_autoencoder_forward.1} parent=0 // pred_check_branch
    %35 = sbr.rel (0) target = $region37
  $region36: #{deep_autoencoder_forward.1} parent=0 // pred_region
    _
  $region37: #{deep_autoencoder_forward.1} parent=0 // pred_fallthru
    _
  // Predicated region
  $region38: #{deep_autoencoder_forward.1} parent=0 // pred_check
    _
  $region39: #{deep_autoencoder_forward.1} parent=0 // pred_check_branch
    %37 = sbr.rel (0) target = $region41
  $region40: #{deep_autoencoder_forward.1} parent=0 // pred_region
    _
  $region41: #{deep_autoencoder_forward.1} parent=0 // pred_fallthru
    _
  // Predicated region
  $region42: #{deep_autoencoder_forward.1} parent=0 // pred_check
    _
  $region43: #{deep_autoencoder_forward.1} parent=0 // pred_check_branch
    %39 = sbr.rel (0) target = $region45
  $region44: #{deep_autoencoder_forward.1} parent=0 // pred_region
    _
  $region45: #{deep_autoencoder_forward.1} parent=0 // pred_fallthru
    _
  // Predicated region
  $region46: #{deep_autoencoder_forward.1} parent=0 // pred_check
    _
  $region47: #{deep_autoencoder_forward.1} parent=0 // pred_check_branch
    %41 = sbr.rel (0) target = $region49
  $region48: #{deep_autoencoder_forward.1} parent=0 // pred_region
    _
  $region49: #{deep_autoencoder_forward.1} parent=0 // pred_fallthru
    _
  // Predicated region
  $region50: #{deep_autoencoder_forward.1} parent=0 // pred_check
    _
  $region51: #{deep_autoencoder_forward.1} parent=0 // pred_check_branch
    %43 = sbr.rel (0) target = $region53
  $region52: #{deep_autoencoder_forward.1} parent=0 // pred_region
    _
  $region53: #{deep_autoencoder_forward.1} parent=0 // pred_fallthru
    _
  %v45 = vld [vmem:[%s0] sm:$0xff]
  %v46 = vld [vmem:[%s0 + $0x8] sm:$0xff]
  %v47 = vld [vmem:[%s0 + $0x10] sm:$0xff]
  %v48 = vld [vmem:[%s0 + $0x18] sm:$0xff]
  %v49 = vld [vmem:[%s0 + $0x20] sm:$0xff]
  %v50 = vld [vmem:[%s0 + $0x28] sm:$0xff]
  %v51 = vld [vmem:[%s0 + $0x30] sm:$0xff]
  %v52 = vld [vmem:[%s0 + $0x38] sm:$0xff]
  %v53 = vld [vmem:[%s0 + $0x40] sm:$0xff]
  %v54 = vld [vmem:[%s0 + $0x48] sm:$0xff]
  %v55 = vld [vmem:[%s0 + $0x50] sm:$0xff]
  %v56 = vld [vmem:[%s0 + $0x58] sm:$0xff]
  %v57 = vld [vmem:[%s0 + $0x60] sm:$0xff]
  %v58 = vld [vmem:[%s0 + $0x68] sm:$0xff]
  %v59 = vpack.c.bf16 %v52, %v45
  %v60 = vpack.c.bf16 %v53, %v46
  %v61 = vpack.c.bf16 %v54, %v47
  %v62 = vpack.c.bf16 %v55, %v48
  %v63 = vpack.c.bf16 %v56, %v49
  %v64 = vpack.c.bf16 %v57, %v50
  %v65 = vpack.c.bf16 %v58, %v51
  %v66 = vld [vmem:[%s1] sm:$0xf]
  %v67 = vld [vmem:[%s1 + $0x4] sm:$0xf]
  %v68 = vld [vmem:[%s1 + $0x8] sm:$0xf]
  %v69 = vld [vmem:[%s1 + $0xc] sm:$0xf]
  %v70 = vld [vmem:[%s1 + $0x10] sm:$0xf]
  %v71 = vld [vmem:[%s1 + $0x14] sm:$0xf]
  %v72 = vld [vmem:[%s1 + $0x18] sm:$0xf]
  %v73 = vld [vmem:[%s1 + $0x1c] sm:$0xf]
  %v74 = vld [vmem:[%s1 + $0x20] sm:$0xf]
  %v75 = vld [vmem:[%s1 + $0x24] sm:$0xf]
  %v76 = vld [vmem:[%s1 + $0x28] sm:$0xf]
  %v77 = vld [vmem:[%s1 + $0x2c] sm:$0xf]
  %v78 = vld [vmem:[%s1 + $0x30] sm:$0xf]
  %v79 = vld [vmem:[%s1 + $0x34] sm:$0xf]
  %v80 = vld [vmem:[%s1 + $0x38] sm:$0xf]
  %v81 = vld [vmem:[%s1 + $0x3c] sm:$0xf]
  %v82 = vld [vmem:[%s1 + $0x40] sm:$0xf]
  %v83 = vld [vmem:[%s1 + $0x44] sm:$0xf]
  %v84 = vld [vmem:[%s1 + $0x48] sm:$0xf]
  %v85 = vld [vmem:[%s1 + $0x4c] sm:$0xf]
  %v86 = vld [vmem:[%s1 + $0x50] sm:$0xf]
  %v87 = vld [vmem:[%s1 + $0x54] sm:$0xf]
  %v88 = vld [vmem:[%s1 + $0x58] sm:$0xf]
  %v89 = vld [vmem:[%s1 + $0x5c] sm:$0xf]
  %v90 = vld [vmem:[%s1 + $0x60] sm:$0xf]
  %v91 = vld [vmem:[%s1 + $0x64] sm:$0xf]
  %v92 = vld [vmem:[%s1 + $0x68] sm:$0xf]
  %v93 = vld [vmem:[%s1 + $0x6c] sm:$0xf]
  %v94 = vld [vmem:[%s1 + $0x70] sm:$0xf]
  %v95 = vld [vmem:[%s1 + $0x74] sm:$0xf]
  %v96 = vld [vmem:[%s1 + $0x78] sm:$0xf]
  %v97 = vld [vmem:[%s1 + $0x7c] sm:$0xf]
  %v98 = vld [vmem:[%s1 + $0x80] sm:$0xf]
  %v99 = vld [vmem:[%s1 + $0x84] sm:$0xf]
  %v100 = vld [vmem:[%s1 + $0x88] sm:$0xf]
  %v101 = vld [vmem:[%s1 + $0x8c] sm:$0xf]
  %v102 = vld [vmem:[%s1 + $0x90] sm:$0xf]
  %v103 = vld [vmem:[%s1 + $0x94] sm:$0xf]
  %v104 = vld [vmem:[%s1 + $0x98] sm:$0xf]
  %v105 = vld [vmem:[%s1 + $0x9c] sm:$0xf]
  %v106 = vld [vmem:[%s1 + $0xa0] sm:$0xf]
  %v107 = vld [vmem:[%s1 + $0xa4] sm:$0xf]
  %v108 = vld [vmem:[%s1 + $0xa8] sm:$0xf]
  %v109 = vld [vmem:[%s1 + $0xac] sm:$0xf]
  %v110 = vld [vmem:[%s1 + $0xb0] sm:$0xf]
  %v111 = vld [vmem:[%s1 + $0xb4] sm:$0xf]
  %v112 = vld [vmem:[%s1 + $0xb8] sm:$0xf]
  %v113 = vld [vmem:[%s1 + $0xbc] sm:$0xf]
  %v114 = vld [vmem:[%s1 + $0xc0] sm:$0xf]
  %v115 = vld [vmem:[%s1 + $0xc4] sm:$0xf]
  %v116 = vld [vmem:[%s1 + $0xc8] sm:$0xf]
  %v117 = vld [vmem:[%s1 + $0xcc] sm:$0xf]
  %v118 = vld [vmem:[%s1 + $0xd0] sm:$0xf]
  %v119 = vld [vmem:[%s1 + $0xd4] sm:$0xf]
  %v120 = vld [vmem:[%s1 + $0xd8] sm:$0xf]
  %v121 = vld [vmem:[%s1 + $0xdc] sm:$0xf]
  %v122 = vld [vmem:[%s1 + $0xe0] sm:$0xf]
  %v123 = vld [vmem:[%s1 + $0xe4] sm:$0xf]
  %v124 = vld [vmem:[%s1 + $0xe8] sm:$0xf]
  %v125 = vld [vmem:[%s1 + $0xec] sm:$0xf]
  %v126 = vld [vmem:[%s1 + $0xf0] sm:$0xf]
  %v127 = vld [vmem:[%s1 + $0xf4] sm:$0xf]
  %v128 = vld [vmem:[%s1 + $0xf8] sm:$0xf]
  %v129 = vld [vmem:[%s1 + $0xfc] sm:$0xf]
  %v130 = vld [vmem:[%s1 + $0x100] sm:$0xf]
  %v131 = vld [vmem:[%s1 + $0x104] sm:$0xf]
  %v132 = vld [vmem:[%s1 + $0x108] sm:$0xf]
  %v133 = vld [vmem:[%s1 + $0x10c] sm:$0xf]
  %v134 = vld [vmem:[%s1 + $0x110] sm:$0xf]
  %v135 = vld [vmem:[%s1 + $0x114] sm:$0xf]
  %v136 = vld [vmem:[%s1 + $0x118] sm:$0xf]
  %v137 = vld [vmem:[%s1 + $0x11c] sm:$0xf]
  %v138 = vld [vmem:[%s1 + $0x120] sm:$0xf]
  %v139 = vld [vmem:[%s1 + $0x124] sm:$0xf]
  %v140 = vld [vmem:[%s1 + $0x128] sm:$0xf]
  %v141 = vld [vmem:[%s1 + $0x12c] sm:$0xf]
  %v142 = vld [vmem:[%s1 + $0x130] sm:$0xf]
  %v143 = vld [vmem:[%s1 + $0x134] sm:$0xf]
  %v144 = vld [vmem:[%s1 + $0x138] sm:$0xf]
  %v145 = vld [vmem:[%s1 + $0x13c] sm:$0xf]
  %v146 = vld [vmem:[%s1 + $0x140] sm:$0xf]
  %v147 = vld [vmem:[%s1 + $0x144] sm:$0xf]
  %v148 = vld [vmem:[%s1 + $0x148] sm:$0xf]
  %v149 = vld [vmem:[%s1 + $0x14c] sm:$0xf]
  %v150 = vld [vmem:[%s1 + $0x150] sm:$0xf]
  %v151 = vld [vmem:[%s1 + $0x154] sm:$0xf]
  %v152 = vld [vmem:[%s1 + $0x158] sm:$0xf]
  %v153 = vld [vmem:[%s1 + $0x15c] sm:$0xf]
  %v154 = vld [vmem:[%s1 + $0x160] sm:$0xf]
  %v155 = vld [vmem:[%s1 + $0x164] sm:$0xf]
  %v156 = vld [vmem:[%s1 + $0x168] sm:$0xf]
  %v157 = vld [vmem:[%s1 + $0x16c] sm:$0xf]
  %v158 = vld [vmem:[%s1 + $0x170] sm:$0xf]
  %v159 = vld [vmem:[%s1 + $0x174] sm:$0xf]
  %v160 = vld [vmem:[%s1 + $0x178] sm:$0xf]
  %v161 = vld [vmem:[%s1 + $0x17c] sm:$0xf]
  %v162 = vld [vmem:[%s1 + $0x180] sm:$0xf]
  %v163 = vld [vmem:[%s1 + $0x184] sm:$0xf]
  %v164 = vld [vmem:[%s2] sm:$0x1]
  %v166 = vperm.slane %v164, 0
  %v266 = vunpack.c.l.b16 %v66
  %v267 = vunpack.c.l.b16 %v67
  %v268 = vunpack.c.l.b16 %v68
  %v269 = vunpack.c.l.b16 %v69
  %v270 = vunpack.c.l.b16 %v70
  %v271 = vunpack.c.l.b16 %v71
  %v272 = vunpack.c.l.b16 %v72
  %v273 = vunpack.c.l.b16 %v73
  %v274 = vunpack.c.l.b16 %v74
  %v275 = vunpack.c.l.b16 %v75
  %v276 = vunpack.c.l.b16 %v76
  %v277 = vunpack.c.l.b16 %v77
  %v278 = vunpack.c.l.b16 %v78
  %v279 = vunpack.c.l.b16 %v79
  %v280 = vunpack.c.l.b16 %v80
  %v281 = vunpack.c.l.b16 %v81
  %v282 = vunpack.c.l.b16 %v82
  %v283 = vunpack.c.l.b16 %v83
  %v284 = vunpack.c.l.b16 %v84
  %v285 = vunpack.c.l.b16 %v85
  %v286 = vunpack.c.l.b16 %v86
  %v287 = vunpack.c.l.b16 %v87
  %v288 = vunpack.c.l.b16 %v88
  %v289 = vunpack.c.l.b16 %v89
  %v290 = vunpack.c.l.b16 %v90
  %v291 = vunpack.c.l.b16 %v91
  %v292 = vunpack.c.l.b16 %v92
  %v293 = vunpack.c.l.b16 %v93
  %v294 = vunpack.c.l.b16 %v94
  %v295 = vunpack.c.l.b16 %v95
  %v296 = vunpack.c.l.b16 %v96
  %v297 = vunpack.c.l.b16 %v97
  %v298 = vunpack.c.l.b16 %v98
  %v299 = vunpack.c.l.b16 %v99
  %v300 = vunpack.c.l.b16 %v100
  %v301 = vunpack.c.l.b16 %v101
  %v302 = vunpack.c.l.b16 %v102
  %v303 = vunpack.c.l.b16 %v103
  %v304 = vunpack.c.l.b16 %v104
  %v305 = vunpack.c.l.b16 %v105
  %v306 = vunpack.c.l.b16 %v106
  %v307 = vunpack.c.l.b16 %v107
  %v308 = vunpack.c.l.b16 %v108
  %v309 = vunpack.c.l.b16 %v109
  %v310 = vunpack.c.l.b16 %v110
  %v311 = vunpack.c.l.b16 %v111
  %v312 = vunpack.c.l.b16 %v112
  %v313 = vunpack.c.l.b16 %v113
  %v314 = vunpack.c.l.b16 %v114
  %v315 = vunpack.c.l.b16 %v115
  %v316 = vunpack.c.l.b16 %v116
  %v317 = vunpack.c.l.b16 %v117
  %v318 = vunpack.c.l.b16 %v118
  %v319 = vunpack.c.l.b16 %v119
  %v320 = vunpack.c.l.b16 %v120
  %v321 = vunpack.c.l.b16 %v121
  %v322 = vunpack.c.l.b16 %v122
  %v323 = vunpack.c.l.b16 %v123
  %v324 = vunpack.c.l.b16 %v124
  %v325 = vunpack.c.l.b16 %v125
  %v326 = vunpack.c.l.b16 %v126
  %v327 = vunpack.c.l.b16 %v127
  %v328 = vunpack.c.l.b16 %v128
  %v329 = vunpack.c.l.b16 %v129
  %v330 = vunpack.c.l.b16 %v130
  %v331 = vunpack.c.l.b16 %v131
  %v332 = vunpack.c.l.b16 %v132
  %v333 = vunpack.c.l.b16 %v133
  %v334 = vunpack.c.l.b16 %v134
  %v335 = vunpack.c.l.b16 %v135
  %v336 = vunpack.c.l.b16 %v136
  %v337 = vunpack.c.l.b16 %v137
  %v338 = vunpack.c.l.b16 %v138
  %v339 = vunpack.c.l.b16 %v139
  %v340 = vunpack.c.l.b16 %v140
  %v341 = vunpack.c.l.b16 %v141
  %v342 = vunpack.c.l.b16 %v142
  %v343 = vunpack.c.l.b16 %v143
  %v344 = vunpack.c.l.b16 %v144
  %v345 = vunpack.c.l.b16 %v145
  %v346 = vunpack.c.l.b16 %v146
  %v347 = vunpack.c.l.b16 %v147
  %v348 = vunpack.c.l.b16 %v148
  %v349 = vunpack.c.l.b16 %v149
  %v350 = vunpack.c.l.b16 %v150
  %v351 = vunpack.c.l.b16 %v151
  %v352 = vunpack.c.l.b16 %v152
  %v353 = vunpack.c.l.b16 %v153
  %v354 = vunpack.c.l.b16 %v154
  %v355 = vunpack.c.l.b16 %v155
  %v356 = vunpack.c.l.b16 %v156
  %v357 = vunpack.c.l.b16 %v157
  %v358 = vunpack.c.l.b16 %v158
  %v359 = vunpack.c.l.b16 %v159
  %v360 = vunpack.c.l.b16 %v160
  %v361 = vunpack.c.l.b16 %v161
  %v362 = vunpack.c.l.b16 %v162
  %v363 = vunpack.c.l.b16 %v163
  %v364 = vpack.c.b16 %v267, %v266
  %v365 = vpack.c.b16 %v269, %v268
  %v366 = vpack.c.b16 %v271, %v270
  %v367 = vpack.c.b16 %v273, %v272
  %v368 = vpack.c.b16 %v275, %v274
  %v369 = vpack.c.b16 %v277, %v276
  %v370 = vpack.c.b16 %v279, %v278
  %v371 = vpack.c.b16 %v281, %v280
  %v372 = vpack.c.b16 %v283, %v282
  %v373 = vpack.c.b16 %v285, %v284
  %v374 = vpack.c.b16 %v287, %v286
  %v375 = vpack.c.b16 %v289, %v288
  %v376 = vpack.c.b16 %v291, %v290
  %v377 = vpack.c.b16 %v293, %v292
  %v378 = vpack.c.b16 %v295, %v294
  %v379 = vpack.c.b16 %v297, %v296
  %v380 = vpack.c.b16 %v299, %v298
  %v381 = vpack.c.b16 %v301, %v300
  %v382 = vpack.c.b16 %v303, %v302
  %v383 = vpack.c.b16 %v305, %v304
  %v384 = vpack.c.b16 %v307, %v306
  %v385 = vpack.c.b16 %v309, %v308
  %v386 = vpack.c.b16 %v311, %v310
  %v387 = vpack.c.b16 %v313, %v312
  %v388 = vpack.c.b16 %v315, %v314
  %v389 = vpack.c.b16 %v317, %v316
  %v390 = vpack.c.b16 %v319, %v318
  %v391 = vpack.c.b16 %v321, %v320
  %v392 = vpack.c.b16 %v323, %v322
  %v393 = vpack.c.b16 %v325, %v324
  %v394 = vpack.c.b16 %v327, %v326
  %v395 = vpack.c.b16 %v329, %v328
  %v396 = vpack.c.b16 %v331, %v330
  %v397 = vpack.c.b16 %v333, %v332
  %v398 = vpack.c.b16 %v335, %v334
  %v399 = vpack.c.b16 %v337, %v336
  %v400 = vpack.c.b16 %v339, %v338
  %v401 = vpack.c.b16 %v341, %v340
  %v402 = vpack.c.b16 %v343, %v342
  %v403 = vpack.c.b16 %v345, %v344
  %v404 = vpack.c.b16 %v347, %v346
  %v405 = vpack.c.b16 %v349, %v348
  %v406 = vpack.c.b16 %v351, %v350
  %v407 = vpack.c.b16 %v353, %v352
  %v408 = vpack.c.b16 %v355, %v354
  %v409 = vpack.c.b16 %v357, %v356
  %v410 = vpack.c.b16 %v359, %v358
  %v411 = vpack.c.b16 %v361, %v360
  %v412 = vpack.c.b16 %v363, %v362
  %vm462 = vcmask 130048
  %v464 = vsel %vm462, %v65, 0
  %466 = vmatpush.bf16.msra.mxu0 %v371
  %467 = vmatpush.bf16.msra.mxu0 %v370
  %468 = vmatpush.bf16.msra.mxu0 %v369
  %469 = vmatpush.bf16.msra.mxu0 %v368
  %470 = vmatpush.bf16.msra.mxu0 %v367
  %471 = vmatpush.bf16.msra.mxu0 %v366
  %472 = vmatpush.bf16.msra.mxu0 %v365
  %473 = vmatpush.bf16.msra.mxu0 %v364
  %474 = vmatmul.bf16.gmra.mxu0 %v59
  %v475 = vpop.f32.mrf.mxu0
  %v476 = vadd.f32 %v166, %v475
  %v477 = vpop.f32.mrf.mxu0
  %v478 = vadd.f32 %v166, %v477
  %479 = vdwg.mxu0
  %480 = vmatpush.bf16.msra.mxu0 %v379
  %481 = vmatpush.bf16.msra.mxu0 %v378
  %482 = vmatpush.bf16.msra.mxu0 %v377
  %483 = vmatpush.bf16.msra.mxu0 %v376
  %484 = vmatpush.bf16.msra.mxu0 %v375
  %485 = vmatpush.bf16.msra.mxu0 %v374
  %486 = vmatpush.bf16.msra.mxu0 %v373
  %487 = vmatpush.bf16.msra.mxu0 %v372
  %488 = vmatmul.bf16.gmra.mxu0 %v60
  %v489 = vpop.f32.mrf.mxu0
  %v490 = vadd.f32 %v476, %v489
  %v491 = vpop.f32.mrf.mxu0
  %v492 = vadd.f32 %v478, %v491
  %493 = vdwg.mxu0
  %494 = vmatpush.bf16.msra.mxu0 %v387
  %495 = vmatpush.bf16.msra.mxu0 %v386
  %496 = vmatpush.bf16.msra.mxu0 %v385
  %497 = vmatpush.bf16.msra.mxu0 %v384
  %498 = vmatpush.bf16.msra.mxu0 %v383
  %499 = vmatpush.bf16.msra.mxu0 %v382
  %500 = vmatpush.bf16.msra.mxu0 %v381
  %501 = vmatpush.bf16.msra.mxu0 %v380
  %502 = vmatmul.bf16.gmra.mxu0 %v61
  %v503 = vpop.f32.mrf.mxu0
  %v504 = vadd.f32 %v490, %v503
  %v505 = vpop.f32.mrf.mxu0
  %v506 = vadd.f32 %v492, %v505
  %507 = vdwg.mxu0
  %508 = vmatpush.bf16.msra.mxu0 %v395
  %509 = vmatpush.bf16.msra.mxu0 %v394
  %510 = vmatpush.bf16.msra.mxu0 %v393
  %511 = vmatpush.bf16.msra.mxu0 %v392
  %512 = vmatpush.bf16.msra.mxu0 %v391
  %513 = vmatpush.bf16.msra.mxu0 %v390
  %514 = vmatpush.bf16.msra.mxu0 %v389
  %515 = vmatpush.bf16.msra.mxu0 %v388
  %516 = vmatmul.bf16.gmra.mxu0 %v62
  %v517 = vpop.f32.mrf.mxu0
  %v518 = vadd.f32 %v504, %v517
  %v519 = vpop.f32.mrf.mxu0
  %v520 = vadd.f32 %v506, %v519
  %521 = vdwg.mxu0
  %522 = vmatpush.bf16.msra.mxu0 %v403
  %523 = vmatpush.bf16.msra.mxu0 %v402
  %524 = vmatpush.bf16.msra.mxu0 %v401
  %525 = vmatpush.bf16.msra.mxu0 %v400
  %526 = vmatpush.bf16.msra.mxu0 %v399
  %527 = vmatpush.bf16.msra.mxu0 %v398
  %528 = vmatpush.bf16.msra.mxu0 %v397
  %529 = vmatpush.bf16.msra.mxu0 %v396
  %530 = vmatmul.bf16.gmra.mxu0 %v63
  %v531 = vpop.f32.mrf.mxu0
  %v532 = vadd.f32 %v518, %v531
  %v533 = vpop.f32.mrf.mxu0
  %v534 = vadd.f32 %v520, %v533
  %535 = vdwg.mxu0
  %536 = vmatpush.bf16.msra.mxu0 %v411
  %537 = vmatpush.bf16.msra.mxu0 %v410
  %538 = vmatpush.bf16.msra.mxu0 %v409
  %539 = vmatpush.bf16.msra.mxu0 %v408
  %540 = vmatpush.bf16.msra.mxu0 %v407
  %541 = vmatpush.bf16.msra.mxu0 %v406
  %542 = vmatpush.bf16.msra.mxu0 %v405
  %543 = vmatpush.bf16.msra.mxu0 %v404
  %544 = vmatmul.bf16.gmra.mxu0 %v64
  %v545 = vpop.f32.mrf.mxu0
  %v546 = vadd.f32 %v532, %v545
  %v547 = vpop.f32.mrf.mxu0
  %v548 = vadd.f32 %v534, %v547
  %549 = vdwg.mxu0
  %550 = vmatpush.bf16.msra.mxu0 0
  %551 = vmatpush.bf16.msra.mxu0 0
  %552 = vmatpush.bf16.msra.mxu0 0
  %553 = vmatpush.bf16.msra.mxu0 0
  %554 = vmatpush.bf16.msra.mxu0 0
  %555 = vmatpush.bf16.msra.mxu0 0
  %556 = vmatpush.bf16.msra.mxu0 0
  %557 = vmatpush.bf16.msra.mxu0 %v412
  %558 = vmatmul.bf16.gmra.mxu0 %v464
  %v559 = vpop.f32.mrf.mxu0
  %v560 = vadd.f32 %v546, %v559
  %v561 = vpop.f32.mrf.mxu0
  %v562 = vadd.f32 %v548, %v561
  %563 = vdwg.mxu0
  %v564 = vmax.f32 %v560, 0.0
  %v565 = vmax.f32 %v562, 0.0
  %v566 = vld [vmem:[%s3] sm:$0xff]
  %v567 = vld [vmem:[%s3 + $0x8] sm:$0xff]
  %v568 = vld [vmem:[%s3 + $0x10] sm:$0xff]
  %v569 = vld [vmem:[%s3 + $0x18] sm:$0xff]
  %v570 = vld [vmem:[%s3 + $0x20] sm:$0xff]
  %v571 = vld [vmem:[%s3 + $0x28] sm:$0xff]
  %v572 = vld [vmem:[%s3 + $0x30] sm:$0xff]
  %v573 = vld [vmem:[%s3 + $0x38] sm:$0xff]
  %v574 = vld [vmem:[%s3 + $0x40] sm:$0xff]
  %v575 = vld [vmem:[%s3 + $0x48] sm:$0xff]
  %v576 = vld [vmem:[%s3 + $0x50] sm:$0xff]
  %v577 = vld [vmem:[%s3 + $0x58] sm:$0xff]
  %v578 = vld [vmem:[%s3 + $0x60] sm:$0xff]
  %v579 = vld [vmem:[%s3 + $0x68] sm:$0xff]
  %v580 = vld [vmem:[%s3 + $0x70] sm:$0xff]
  %v581 = vld [vmem:[%s3 + $0x78] sm:$0xff]
  %v582 = vld [vmem:[%s4] sm:$0x1]
  %v584 = vperm.slane %v582, 0
  %586 = vmatpush.msra.mxu0 %v581
  %587 = vmatpush.msra.mxu0 %v580
  %588 = vmatpush.msra.mxu0 %v579
  %589 = vmatpush.msra.mxu0 %v578
  %590 = vmatpush.msra.mxu0 %v577
  %591 = vmatpush.msra.mxu0 %v576
  %592 = vmatpush.msra.mxu0 %v575
  %593 = vmatpush.msra.mxu0 %v574
  %594 = vmatpush.msra.mxu0 %v573
  %595 = vmatpush.msra.mxu0 %v572
  %596 = vmatpush.msra.mxu0 %v571
  %597 = vmatpush.msra.mxu0 %v570
  %598 = vmatpush.msra.mxu0 %v569
  %599 = vmatpush.msra.mxu0 %v568
  %600 = vmatpush.msra.mxu0 %v567
  %601 = vmatpush.msra.mxu0 %v566
  %602 = vmatmul.f32.gmra.mxu0 %v564
  %v603 = vpop.f32.mrf.mxu0
  %v604 = vadd.f32 %v584, %v603
  %605 = vmatmul.f32.gmra.mxu0 %v565
  %v606 = vpop.f32.mrf.mxu0
  %v607 = vadd.f32 %v584, %v606
  %608 = vdwg.mxu0
  %v609 = vmax.f32 %v604, 0.0
  %v610 = vmax.f32 %v607, 0.0
  %v611 = vld [vmem:[%s5] sm:$0xff]
  %v612 = vld [vmem:[%s5 + $0x8] sm:$0xff]
  %v613 = vld [vmem:[%s5 + $0x10] sm:$0xff]
  %v614 = vld [vmem:[%s5 + $0x18] sm:$0xff]
  %v615 = vld [vmem:[%s5 + $0x20] sm:$0xff]
  %v616 = vld [vmem:[%s5 + $0x28] sm:$0xff]
  %v617 = vld [vmem:[%s5 + $0x30] sm:$0xff]
  %v618 = vld [vmem:[%s5 + $0x38] sm:$0xff]
  %v619 = vld [vmem:[%s6] sm:$0x1]
  %v621 = vperm.slane %v619, 0
  %vm623 = vcmask 523264
  %v625 = vsel %vm623, %v609, 0
  %v628 = vsel %vm623, %v610, 0
  %630 = vmatpush.msra.mxu0 0.0
  %631 = vmatpush.msra.mxu0 0.0
  %632 = vmatpush.msra.mxu0 0.0
  %633 = vmatpush.msra.mxu0 0.0
  %634 = vmatpush.msra.mxu0 0.0
  %635 = vmatpush.msra.mxu0 0.0
  %636 = vmatpush.msra.mxu0 0.0
  %637 = vmatpush.msra.mxu0 0.0
  %638 = vmatpush.msra.mxu0 %v618
  %639 = vmatpush.msra.mxu0 %v617
  %640 = vmatpush.msra.mxu0 %v616
  %641 = vmatpush.msra.mxu0 %v615
  %642 = vmatpush.msra.mxu0 %v614
  %643 = vmatpush.msra.mxu0 %v613
  %644 = vmatpush.msra.mxu0 %v612
  %645 = vmatpush.msra.mxu0 %v611
  %646 = vmatmul.f32.gmra.mxu0 %v625
  %v647 = vpop.f32.mrf.mxu0
  %v648 = vadd.f32 %v621, %v647
  %649 = vmatmul.f32.gmra.mxu0 %v628
  %v650 = vpop.f32.mrf.mxu0
  %v651 = vadd.f32 %v621, %v650
  %652 = vdwg.mxu0
  %v653 = vmax.f32 %v648, 0.0
  %v654 = vmax.f32 %v651, 0.0
  %v655 = vld [vmem:[%s7] sm:$0xff]
  %v656 = vld [vmem:[%s7 + $0x8] sm:$0xff]
  %v657 = vld [vmem:[%s7 + $0x10] sm:$0xff]
  %v658 = vld [vmem:[%s7 + $0x18] sm:$0xff]
  %v659 = vld [vmem:[%s8] sm:$0x1]
  %v661 = vperm.slane %v659, 0
  %vm663 = vcmask 261120
  %v665 = vsel %vm663, %v653, 0
  %v668 = vsel %vm663, %v654, 0
  %670 = vmatpush.msra.mxu0 0.0
  %671 = vmatpush.msra.mxu0 0.0
  %672 = vmatpush.msra.mxu0 0.0
  %673 = vmatpush.msra.mxu0 0.0
  %674 = vmatpush.msra.mxu0 0.0
  %675 = vmatpush.msra.mxu0 0.0
  %676 = vmatpush.msra.mxu0 0.0
  %677 = vmatpush.msra.mxu0 0.0
  %678 = vmatpush.msra.mxu0 0.0
  %679 = vmatpush.msra.mxu0 0.0
  %680 = vmatpush.msra.mxu0 0.0
  %681 = vmatpush.msra.mxu0 0.0
  %682 = vmatpush.msra.mxu0 %v658
  %683 = vmatpush.msra.mxu0 %v657
  %684 = vmatpush.msra.mxu0 %v656
  %685 = vmatpush.msra.mxu0 %v655
  %686 = vmatmul.f32.gmra.mxu0 %v665
  %v687 = vpop.f32.mrf.mxu0
  %v688 = vadd.f32 %v661, %v687
  %689 = vmatmul.f32.gmra.mxu0 %v668
  %v690 = vpop.f32.mrf.mxu0
  %v691 = vadd.f32 %v661, %v690
  %692 = vdwg.mxu0
  %v693 = vmax.f32 %v688, 0.0
  %v694 = vmax.f32 %v691, 0.0
  %v695 = vld [vmem:[%s9] sm:$0xff]
  %v696 = vld [vmem:[%s9 + $0x8] sm:$0xff]
  %v697 = vld [vmem:[%s9 + $0x10] sm:$0xff]
  %v698 = vld [vmem:[%s9 + $0x18] sm:$0xff]
  %v699 = vld [vmem:[%s9 + $0x20] sm:$0xff]
  %v700 = vld [vmem:[%s9 + $0x28] sm:$0xff]
  %v701 = vld [vmem:[%s9 + $0x30] sm:$0xff]
  %v702 = vld [vmem:[%s9 + $0x38] sm:$0xff]
  %v703 = vld [vmem:[%s10] sm:$0x1]
  %v705 = vperm.slane %v703, 0
  %v708 = vsel %vm623, %v693, 0
  %v711 = vsel %vm623, %v694, 0
  %713 = vmatpush.msra.mxu0 0.0
  %714 = vmatpush.msra.mxu0 0.0
  %715 = vmatpush.msra.mxu0 0.0
  %716 = vmatpush.msra.mxu0 0.0
  %717 = vmatpush.msra.mxu0 0.0
  %718 = vmatpush.msra.mxu0 0.0
  %719 = vmatpush.msra.mxu0 0.0
  %720 = vmatpush.msra.mxu0 0.0
  %721 = vmatpush.msra.mxu0 %v702
  %722 = vmatpush.msra.mxu0 %v701
  %723 = vmatpush.msra.mxu0 %v700
  %724 = vmatpush.msra.mxu0 %v699
  %725 = vmatpush.msra.mxu0 %v698
  %726 = vmatpush.msra.mxu0 %v697
  %727 = vmatpush.msra.mxu0 %v696
  %728 = vmatpush.msra.mxu0 %v695
  %729 = vmatmul.f32.gmra.mxu0 %v708
  %v730 = vpop.f32.mrf.mxu0
  %v731 = vadd.f32 %v705, %v730
  %732 = vmatmul.f32.gmra.mxu0 %v711
  %v733 = vpop.f32.mrf.mxu0
  %v734 = vadd.f32 %v705, %v733
  %735 = vdwg.mxu0
  %v736 = vmax.f32 %v731, 0.0
  %v737 = vmax.f32 %v734, 0.0
  %v738 = vpack.c.bf16 %v737, %v736
  %v739 = vld [vmem:[%s11] sm:$0xff]
  %v740 = vld [vmem:[%s11 + $0x8] sm:$0xff]
  %v741 = vld [vmem:[%s11 + $0x10] sm:$0xff]
  %v742 = vld [vmem:[%s11 + $0x18] sm:$0xf]
  %v743 = vld [vmem:[%s11 + $0x1c] sm:$0xff]
  %v744 = vld [vmem:[%s11 + $0x24] sm:$0xff]
  %v745 = vld [vmem:[%s11 + $0x2c] sm:$0xff]
  %v746 = vld [vmem:[%s11 + $0x34] sm:$0xf]
  %v747 = vld [vmem:[%s11 + $0x38] sm:$0xff]
  %v748 = vld [vmem:[%s11 + $0x40] sm:$0xff]
  %v749 = vld [vmem:[%s11 + $0x48] sm:$0xff]
  %v750 = vld [vmem:[%s11 + $0x50] sm:$0xf]
  %v751 = vld [vmem:[%s11 + $0x54] sm:$0xff]
  %v752 = vld [vmem:[%s11 + $0x5c] sm:$0xff]
  %v753 = vld [vmem:[%s11 + $0x64] sm:$0xff]
  %v754 = vld [vmem:[%s11 + $0x6c] sm:$0xf]
  %v755 = vld [vmem:[%s11 + $0x70] sm:$0xff]
  %v756 = vld [vmem:[%s11 + $0x78] sm:$0xff]
  %v757 = vld [vmem:[%s11 + $0x80] sm:$0xff]
  %v758 = vld [vmem:[%s11 + $0x88] sm:$0xf]
  %v759 = vld [vmem:[%s11 + $0x8c] sm:$0xff]
  %v760 = vld [vmem:[%s11 + $0x94] sm:$0xff]
  %v761 = vld [vmem:[%s11 + $0x9c] sm:$0xff]
  %v762 = vld [vmem:[%s11 + $0xa4] sm:$0xf]
  %v763 = vld [vmem:[%s11 + $0xa8] sm:$0xff]
  %v764 = vld [vmem:[%s11 + $0xb0] sm:$0xff]
  %v765 = vld [vmem:[%s11 + $0xb8] sm:$0xff]
  %v766 = vld [vmem:[%s11 + $0xc0] sm:$0xf]
  %v767 = vld [vmem:[%s11 + $0xc4] sm:$0xff]
  %v768 = vld [vmem:[%s11 + $0xcc] sm:$0xff]
  %v769 = vld [vmem:[%s11 + $0xd4] sm:$0xff]
  %v770 = vld [vmem:[%s11 + $0xdc] sm:$0xf]
  %v771 = vld [vmem:[%s11 + $0xe0] sm:$0xff]
  %v772 = vld [vmem:[%s11 + $0xe8] sm:$0xff]
  %v773 = vld [vmem:[%s11 + $0xf0] sm:$0xff]
  %v774 = vld [vmem:[%s11 + $0xf8] sm:$0xf]
  %v775 = vld [vmem:[%s11 + $0xfc] sm:$0xff]
  %v776 = vld [vmem:[%s11 + $0x104] sm:$0xff]
  %v777 = vld [vmem:[%s11 + $0x10c] sm:$0xff]
  %v778 = vld [vmem:[%s11 + $0x114] sm:$0xf]
  %v779 = vld [vmem:[%s11 + $0x118] sm:$0xff]
  %v780 = vld [vmem:[%s11 + $0x120] sm:$0xff]
  %v781 = vld [vmem:[%s11 + $0x128] sm:$0xff]
  %v782 = vld [vmem:[%s11 + $0x130] sm:$0xf]
  %v783 = vld [vmem:[%s11 + $0x134] sm:$0xff]
  %v784 = vld [vmem:[%s11 + $0x13c] sm:$0xff]
  %v785 = vld [vmem:[%s11 + $0x144] sm:$0xff]
  %v786 = vld [vmem:[%s11 + $0x14c] sm:$0xf]
  %v787 = vld [vmem:[%s11 + $0x150] sm:$0xff]
  %v788 = vld [vmem:[%s11 + $0x158] sm:$0xff]
  %v789 = vld [vmem:[%s11 + $0x160] sm:$0xff]
  %v790 = vld [vmem:[%s11 + $0x168] sm:$0xf]
  %v791 = vld [vmem:[%s11 + $0x16c] sm:$0xff]
  %v792 = vld [vmem:[%s11 + $0x174] sm:$0xff]
  %v793 = vld [vmem:[%s11 + $0x17c] sm:$0xff]
  %v794 = vld [vmem:[%s11 + $0x184] sm:$0xf]
  %v795 = vld [vmem:[%s11 + $0x188] sm:$0xff]
  %v796 = vld [vmem:[%s11 + $0x190] sm:$0xff]
  %v797 = vld [vmem:[%s11 + $0x198] sm:$0xff]
  %v798 = vld [vmem:[%s11 + $0x1a0] sm:$0xf]
  %v799 = vld [vmem:[%s11 + $0x1a4] sm:$0xff]
  %v800 = vld [vmem:[%s11 + $0x1ac] sm:$0xff]
  %v801 = vld [vmem:[%s11 + $0x1b4] sm:$0xff]
  %v802 = vld [vmem:[%s11 + $0x1bc] sm:$0xf]
  %v803 = vld [vmem:[%s12] sm:$0x7f]
  %v805 = vperm.slane %v803, 0
  %v806 = vperm.slane %v803, 1
  %v807 = vperm.slane %v803, 2
  %v808 = vperm.slane %v803, 3
  %v809 = vperm.slane %v803, 4
  %v810 = vperm.slane %v803, 5
  %v811 = vperm.slane %v803, 6
  %v883 = vunpack.c.l.b16 %v739
  %v884 = vunpack.c.h.b16 %v739
  %v885 = vunpack.c.l.b16 %v740
  %v886 = vunpack.c.h.b16 %v740
  %v887 = vunpack.c.l.b16 %v741
  %v888 = vunpack.c.h.b16 %v741
  %v889 = vunpack.c.l.b16 %v742
  %v890 = vunpack.c.l.b16 %v743
  %v891 = vunpack.c.h.b16 %v743
  %v892 = vunpack.c.l.b16 %v744
  %v893 = vunpack.c.h.b16 %v744
  %v894 = vunpack.c.l.b16 %v745
  %v895 = vunpack.c.h.b16 %v745
  %v896 = vunpack.c.l.b16 %v746
  %v897 = vunpack.c.l.b16 %v747
  %v898 = vunpack.c.h.b16 %v747
  %v899 = vunpack.c.l.b16 %v748
  %v900 = vunpack.c.h.b16 %v748
  %v901 = vunpack.c.l.b16 %v749
  %v902 = vunpack.c.h.b16 %v749
  %v903 = vunpack.c.l.b16 %v750
  %v904 = vunpack.c.l.b16 %v751
  %v905 = vunpack.c.h.b16 %v751
  %v906 = vunpack.c.l.b16 %v752
  %v907 = vunpack.c.h.b16 %v752
  %v908 = vunpack.c.l.b16 %v753
  %v909 = vunpack.c.h.b16 %v753
  %v910 = vunpack.c.l.b16 %v754
  %v911 = vunpack.c.l.b16 %v755
  %v912 = vunpack.c.h.b16 %v755
  %v913 = vunpack.c.l.b16 %v756
  %v914 = vunpack.c.h.b16 %v756
  %v915 = vunpack.c.l.b16 %v757
  %v916 = vunpack.c.h.b16 %v757
  %v917 = vunpack.c.l.b16 %v758
  %v918 = vunpack.c.l.b16 %v759
  %v919 = vunpack.c.h.b16 %v759
  %v920 = vunpack.c.l.b16 %v760
  %v921 = vunpack.c.h.b16 %v760
  %v922 = vunpack.c.l.b16 %v761
  %v923 = vunpack.c.h.b16 %v761
  %v924 = vunpack.c.l.b16 %v762
  %v925 = vunpack.c.l.b16 %v763
  %v926 = vunpack.c.h.b16 %v763
  %v927 = vunpack.c.l.b16 %v764
  %v928 = vunpack.c.h.b16 %v764
  %v929 = vunpack.c.l.b16 %v765
  %v930 = vunpack.c.h.b16 %v765
  %v931 = vunpack.c.l.b16 %v766
  %v932 = vunpack.c.l.b16 %v767
  %v933 = vunpack.c.h.b16 %v767
  %v934 = vunpack.c.l.b16 %v768
  %v935 = vunpack.c.h.b16 %v768
  %v936 = vunpack.c.l.b16 %v769
  %v937 = vunpack.c.h.b16 %v769
  %v938 = vunpack.c.l.b16 %v770
  %v939 = vunpack.c.l.b16 %v771
  %v940 = vunpack.c.h.b16 %v771
  %v941 = vunpack.c.l.b16 %v772
  %v942 = vunpack.c.h.b16 %v772
  %v943 = vunpack.c.l.b16 %v773
  %v944 = vunpack.c.h.b16 %v773
  %v945 = vunpack.c.l.b16 %v774
  %v946 = vunpack.c.l.b16 %v775
  %v947 = vunpack.c.h.b16 %v775
  %v948 = vunpack.c.l.b16 %v776
  %v949 = vunpack.c.h.b16 %v776
  %v950 = vunpack.c.l.b16 %v777
  %v951 = vunpack.c.h.b16 %v777
  %v952 = vunpack.c.l.b16 %v778
  %v953 = vunpack.c.l.b16 %v779
  %v954 = vunpack.c.h.b16 %v779
  %v955 = vunpack.c.l.b16 %v780
  %v956 = vunpack.c.h.b16 %v780
  %v957 = vunpack.c.l.b16 %v781
  %v958 = vunpack.c.h.b16 %v781
  %v959 = vunpack.c.l.b16 %v782
  %v960 = vunpack.c.l.b16 %v783
  %v961 = vunpack.c.h.b16 %v783
  %v962 = vunpack.c.l.b16 %v784
  %v963 = vunpack.c.h.b16 %v784
  %v964 = vunpack.c.l.b16 %v785
  %v965 = vunpack.c.h.b16 %v785
  %v966 = vunpack.c.l.b16 %v786
  %v967 = vunpack.c.l.b16 %v787
  %v968 = vunpack.c.h.b16 %v787
  %v969 = vunpack.c.l.b16 %v788
  %v970 = vunpack.c.h.b16 %v788
  %v971 = vunpack.c.l.b16 %v789
  %v972 = vunpack.c.h.b16 %v789
  %v973 = vunpack.c.l.b16 %v790
  %v974 = vunpack.c.l.b16 %v791
  %v975 = vunpack.c.h.b16 %v791
  %v976 = vunpack.c.l.b16 %v792
  %v977 = vunpack.c.h.b16 %v792
  %v978 = vunpack.c.l.b16 %v793
  %v979 = vunpack.c.h.b16 %v793
  %v980 = vunpack.c.l.b16 %v794
  %v981 = vunpack.c.l.b16 %v795
  %v982 = vunpack.c.h.b16 %v795
  %v983 = vunpack.c.l.b16 %v796
  %v984 = vunpack.c.h.b16 %v796
  %v985 = vunpack.c.l.b16 %v797
  %v986 = vunpack.c.h.b16 %v797
  %v987 = vunpack.c.l.b16 %v798
  %v988 = vunpack.c.l.b16 %v799
  %v989 = vunpack.c.h.b16 %v799
  %v990 = vunpack.c.l.b16 %v800
  %v991 = vunpack.c.h.b16 %v800
  %v992 = vunpack.c.l.b16 %v801
  %v993 = vunpack.c.h.b16 %v801
  %v994 = vunpack.c.l.b16 %v802
  %v995 = vpack.c.b16 %v890, %v883
  %v996 = vpack.c.b16 %v891, %v884
  %v997 = vpack.c.b16 %v892, %v885
  %v998 = vpack.c.b16 %v893, %v886
  %v999 = vpack.c.b16 %v894, %v887
  %v1000 = vpack.c.b16 %v895, %v888
  %v1001 = vpack.c.b16 %v896, %v889
  %v1002 = vpack.c.b16 %v904, %v897
  %v1003 = vpack.c.b16 %v905, %v898
  %v1004 = vpack.c.b16 %v906, %v899
  %v1005 = vpack.c.b16 %v907, %v900
  %v1006 = vpack.c.b16 %v908, %v901
  %v1007 = vpack.c.b16 %v909, %v902
  %v1008 = vpack.c.b16 %v910, %v903
  %v1009 = vpack.c.b16 %v918, %v911
  %v1010 = vpack.c.b16 %v919, %v912
  %v1011 = vpack.c.b16 %v920, %v913
  %v1012 = vpack.c.b16 %v921, %v914
  %v1013 = vpack.c.b16 %v922, %v915
  %v1014 = vpack.c.b16 %v923, %v916
  %v1015 = vpack.c.b16 %v924, %v917
  %v1016 = vpack.c.b16 %v932, %v925
  %v1017 = vpack.c.b16 %v933, %v926
  %v1018 = vpack.c.b16 %v934, %v927
  %v1019 = vpack.c.b16 %v935, %v928
  %v1020 = vpack.c.b16 %v936, %v929
  %v1021 = vpack.c.b16 %v937, %v930
  %v1022 = vpack.c.b16 %v938, %v931
  %v1023 = vpack.c.b16 %v946, %v939
  %v1024 = vpack.c.b16 %v947, %v940
  %v1025 = vpack.c.b16 %v948, %v941
  %v1026 = vpack.c.b16 %v949, %v942
  %v1027 = vpack.c.b16 %v950, %v943
  %v1028 = vpack.c.b16 %v951, %v944
  %v1029 = vpack.c.b16 %v952, %v945
  %v1030 = vpack.c.b16 %v960, %v953
  %v1031 = vpack.c.b16 %v961, %v954
  %v1032 = vpack.c.b16 %v962, %v955
  %v1033 = vpack.c.b16 %v963, %v956
  %v1034 = vpack.c.b16 %v964, %v957
  %v1035 = vpack.c.b16 %v965, %v958
  %v1036 = vpack.c.b16 %v966, %v959
  %v1037 = vpack.c.b16 %v974, %v967
  %v1038 = vpack.c.b16 %v975, %v968
  %v1039 = vpack.c.b16 %v976, %v969
  %v1040 = vpack.c.b16 %v977, %v970
  %v1041 = vpack.c.b16 %v978, %v971
  %v1042 = vpack.c.b16 %v979, %v972
  %v1043 = vpack.c.b16 %v980, %v973
  %v1044 = vpack.c.b16 %v988, %v981
  %v1045 = vpack.c.b16 %v989, %v982
  %v1046 = vpack.c.b16 %v990, %v983
  %v1047 = vpack.c.b16 %v991, %v984
  %v1048 = vpack.c.b16 %v992, %v985
  %v1049 = vpack.c.b16 %v993, %v986
  %v1050 = vpack.c.b16 %v994, %v987
  %1107 = vmatpush.bf16.msra.mxu0 %v1044
  %1108 = vmatpush.bf16.msra.mxu0 %v1037
  %1109 = vmatpush.bf16.msra.mxu0 %v1030
  %1110 = vmatpush.bf16.msra.mxu0 %v1023
  %1111 = vmatpush.bf16.msra.mxu0 %v1016
  %1112 = vmatpush.bf16.msra.mxu0 %v1009
  %1113 = vmatpush.bf16.msra.mxu0 %v1002
  %1114 = vmatpush.bf16.msra.mxu0 %v995
  %1115 = vmatmul.bf16.gmra.mxu0 %v738
  %v1116 = vpop.f32.mrf.mxu0
  %v1117 = vadd.f32 %v805, %v1116
  %v1118 = vpop.f32.mrf.mxu0
  %v1119 = vadd.f32 %v805, %v1118
  %1120 = vdwg.mxu0
  %1121 = vmatpush.bf16.msra.mxu0 %v1045
  %1122 = vmatpush.bf16.msra.mxu0 %v1038
  %1123 = vmatpush.bf16.msra.mxu0 %v1031
  %1124 = vmatpush.bf16.msra.mxu0 %v1024
  %1125 = vmatpush.bf16.msra.mxu0 %v1017
  %1126 = vmatpush.bf16.msra.mxu0 %v1010
  %1127 = vmatpush.bf16.msra.mxu0 %v1003
  %1128 = vmatpush.bf16.msra.mxu0 %v996
  %1129 = vmatmul.bf16.gmra.mxu0 %v738
  %v1130 = vpop.f32.mrf.mxu0
  %v1131 = vadd.f32 %v806, %v1130
  %v1132 = vpop.f32.mrf.mxu0
  %v1133 = vadd.f32 %v806, %v1132
  %1134 = vdwg.mxu0
  %1135 = vmatpush.bf16.msra.mxu0 %v1046
  %1136 = vmatpush.bf16.msra.mxu0 %v1039
  %1137 = vmatpush.bf16.msra.mxu0 %v1032
  %1138 = vmatpush.bf16.msra.mxu0 %v1025
  %1139 = vmatpush.bf16.msra.mxu0 %v1018
  %1140 = vmatpush.bf16.msra.mxu0 %v1011
  %1141 = vmatpush.bf16.msra.mxu0 %v1004
  %1142 = vmatpush.bf16.msra.mxu0 %v997
  %1143 = vmatmul.bf16.gmra.mxu0 %v738
  %v1144 = vpop.f32.mrf.mxu0
  %v1145 = vadd.f32 %v807, %v1144
  %v1146 = vpop.f32.mrf.mxu0
  %v1147 = vadd.f32 %v807, %v1146
  %1148 = vdwg.mxu0
  %1149 = vmatpush.bf16.msra.mxu0 %v1047
  %1150 = vmatpush.bf16.msra.mxu0 %v1040
  %1151 = vmatpush.bf16.msra.mxu0 %v1033
  %1152 = vmatpush.bf16.msra.mxu0 %v1026
  %1153 = vmatpush.bf16.msra.mxu0 %v1019
  %1154 = vmatpush.bf16.msra.mxu0 %v1012
  %1155 = vmatpush.bf16.msra.mxu0 %v1005
  %1156 = vmatpush.bf16.msra.mxu0 %v998
  %1157 = vmatmul.bf16.gmra.mxu0 %v738
  %v1158 = vpop.f32.mrf.mxu0
  %v1159 = vadd.f32 %v808, %v1158
  %v1160 = vpop.f32.mrf.mxu0
  %v1161 = vadd.f32 %v808, %v1160
  %1162 = vdwg.mxu0
  %1163 = vmatpush.bf16.msra.mxu0 %v1048
  %1164 = vmatpush.bf16.msra.mxu0 %v1041
  %1165 = vmatpush.bf16.msra.mxu0 %v1034
  %1166 = vmatpush.bf16.msra.mxu0 %v1027
  %1167 = vmatpush.bf16.msra.mxu0 %v1020
  %1168 = vmatpush.bf16.msra.mxu0 %v1013
  %1169 = vmatpush.bf16.msra.mxu0 %v1006
  %1170 = vmatpush.bf16.msra.mxu0 %v999
  %1171 = vmatmul.bf16.gmra.mxu0 %v738
  %v1172 = vpop.f32.mrf.mxu0
  %v1173 = vadd.f32 %v809, %v1172
  %v1174 = vpop.f32.mrf.mxu0
  %v1175 = vadd.f32 %v809, %v1174
  %1176 = vdwg.mxu0
  %1177 = vmatpush.bf16.msra.mxu0 %v1049
  %1178 = vmatpush.bf16.msra.mxu0 %v1042
  %1179 = vmatpush.bf16.msra.mxu0 %v1035
  %1180 = vmatpush.bf16.msra.mxu0 %v1028
  %1181 = vmatpush.bf16.msra.mxu0 %v1021
  %1182 = vmatpush.bf16.msra.mxu0 %v1014
  %1183 = vmatpush.bf16.msra.mxu0 %v1007
  %1184 = vmatpush.bf16.msra.mxu0 %v1000
  %1185 = vmatmul.bf16.gmra.mxu0 %v738
  %v1186 = vpop.f32.mrf.mxu0
  %v1187 = vadd.f32 %v810, %v1186
  %v1188 = vpop.f32.mrf.mxu0
  %v1189 = vadd.f32 %v810, %v1188
  %1190 = vdwg.mxu0
  %1191 = vmatpush.bf16.msra.mxu0 %v1050
  %1192 = vmatpush.bf16.msra.mxu0 %v1043
  %1193 = vmatpush.bf16.msra.mxu0 %v1036
  %1194 = vmatpush.bf16.msra.mxu0 %v1029
  %1195 = vmatpush.bf16.msra.mxu0 %v1022
  %1196 = vmatpush.bf16.msra.mxu0 %v1015
  %1197 = vmatpush.bf16.msra.mxu0 %v1008
  %1198 = vmatpush.bf16.msra.mxu0 %v1001
  %1199 = vmatmul.bf16.gmra.mxu0 %v738
  %v1200 = vpop.f32.mrf.mxu0
  %v1201 = vadd.f32 %v811, %v1200
  %v1202 = vpop.f32.mrf.mxu0
  %v1203 = vadd.f32 %v811, %v1202
  %1204 = vdwg.mxu0
  %v1205 = vxor.u32 %v1117, 2147483648
  %v1206 = vxor.u32 %v1131, 2147483648
  %v1207 = vxor.u32 %v1145, 2147483648
  %v1208 = vxor.u32 %v1159, 2147483648
  %v1209 = vxor.u32 %v1173, 2147483648
  %v1210 = vxor.u32 %v1187, 2147483648
  %v1211 = vxor.u32 %v1201, 2147483648
  %v1212 = vxor.u32 %v1119, 2147483648
  %v1213 = vxor.u32 %v1133, 2147483648
  %v1214 = vxor.u32 %v1147, 2147483648
  %v1215 = vxor.u32 %v1161, 2147483648
  %v1216 = vxor.u32 %v1175, 2147483648
  %v1217 = vxor.u32 %v1189, 2147483648
  %v1218 = vxor.u32 %v1203, 2147483648
  %v1219 = vmul.f32 %v1205, 1.442695
  %v1220 = vpow.pop %v1219
  %v1221 = vmul.f32 %v1206, 1.442695
  %v1222 = vpow.pop %v1221
  %v1223 = vmul.f32 %v1207, 1.442695
  %v1224 = vpow.pop %v1223
  %v1225 = vmul.f32 %v1208, 1.442695
  %v1226 = vpow.pop %v1225
  %v1227 = vmul.f32 %v1209, 1.442695
  %v1228 = vpow.pop %v1227
  %v1229 = vmul.f32 %v1210, 1.442695
  %v1230 = vpow.pop %v1229
  %v1231 = vmul.f32 %v1211, 1.442695
  %v1232 = vpow.pop %v1231
  %v1233 = vmul.f32 %v1212, 1.442695
  %v1234 = vpow.pop %v1233
  %v1235 = vmul.f32 %v1213, 1.442695
  %v1236 = vpow.pop %v1235
  %v1237 = vmul.f32 %v1214, 1.442695
  %v1238 = vpow.pop %v1237
  %v1239 = vmul.f32 %v1215, 1.442695
  %v1240 = vpow.pop %v1239
  %v1241 = vmul.f32 %v1216, 1.442695
  %v1242 = vpow.pop %v1241
  %v1243 = vmul.f32 %v1217, 1.442695
  %v1244 = vpow.pop %v1243
  %v1245 = vmul.f32 %v1218, 1.442695
  %v1246 = vpow.pop %v1245
  %v1247 = vadd.f32 %v1220, 1.0
  %v1248 = vadd.f32 %v1222, 1.0
  %v1249 = vadd.f32 %v1224, 1.0
  %v1250 = vadd.f32 %v1226, 1.0
  %v1251 = vadd.f32 %v1228, 1.0
  %v1252 = vadd.f32 %v1230, 1.0
  %v1253 = vadd.f32 %v1232, 1.0
  %v1254 = vadd.f32 %v1234, 1.0
  %v1255 = vadd.f32 %v1236, 1.0
  %v1256 = vadd.f32 %v1238, 1.0
  %v1257 = vadd.f32 %v1240, 1.0
  %v1258 = vadd.f32 %v1242, 1.0
  %v1259 = vadd.f32 %v1244, 1.0
  %v1260 = vadd.f32 %v1246, 1.0
  %v1261 = vrcp.pop %v1247
  %v1262 = vmul.f32 %v1247, %v1261
  %v1263 = vsub.f32 1.0, %v1262
  %v1264 = vmul.f32 %v1261, %v1263
  %v1265 = vadd.f32 %v1261, %v1264
  %vm1266 = vweird.f32 %v1247
  %vm1267 = vweird.f32 %v1261
  %vm1268 = vmor %vm1266, %vm1267
  %v1269 = vsel %vm1268, %v1261, %v1265
  %v1270 = vand.u32 2147483647, %v1247
  %vm1271 = vcmp.eq.f32.partialorder %v1270, 8.507059e+37
  %v1272 = vand.u32 %v1247, 2147483648
  %v1273 = vor.u32 1.1754944e-38, %v1272
  %v1274 = vsel %vm1271, %v1273, %v1269
  %v1275 = vmul.f32 1.0, %v1274
  %v1276 = vrcp.pop %v1248
  %v1277 = vmul.f32 %v1248, %v1276
  %v1278 = vsub.f32 1.0, %v1277
  %v1279 = vmul.f32 %v1276, %v1278
  %v1280 = vadd.f32 %v1276, %v1279
  %vm1281 = vweird.f32 %v1248
  %vm1282 = vweird.f32 %v1276
  %vm1283 = vmor %vm1281, %vm1282
  %v1284 = vsel %vm1283, %v1276, %v1280
  %v1285 = vand.u32 2147483647, %v1248
  %vm1286 = vcmp.eq.f32.partialorder %v1285, 8.507059e+37
  %v1287 = vand.u32 %v1248, 2147483648
  %v1288 = vor.u32 1.1754944e-38, %v1287
  %v1289 = vsel %vm1286, %v1288, %v1284
  %v1290 = vmul.f32 1.0, %v1289
  %v1291 = vrcp.pop %v1249
  %v1292 = vmul.f32 %v1249, %v1291
  %v1293 = vsub.f32 1.0, %v1292
  %v1294 = vmul.f32 %v1291, %v1293
  %v1295 = vadd.f32 %v1291, %v1294
  %vm1296 = vweird.f32 %v1249
  %vm1297 = vweird.f32 %v1291
  %vm1298 = vmor %vm1296, %vm1297
  %v1299 = vsel %vm1298, %v1291, %v1295
  %v1300 = vand.u32 2147483647, %v1249
  %vm1301 = vcmp.eq.f32.partialorder %v1300, 8.507059e+37
  %v1302 = vand.u32 %v1249, 2147483648
  %v1303 = vor.u32 1.1754944e-38, %v1302
  %v1304 = vsel %vm1301, %v1303, %v1299
  %v1305 = vmul.f32 1.0, %v1304
  %v1306 = vrcp.pop %v1250
  %v1307 = vmul.f32 %v1250, %v1306
  %v1308 = vsub.f32 1.0, %v1307
  %v1309 = vmul.f32 %v1306, %v1308
  %v1310 = vadd.f32 %v1306, %v1309
  %vm1311 = vweird.f32 %v1250
  %vm1312 = vweird.f32 %v1306
  %vm1313 = vmor %vm1311, %vm1312
  %v1314 = vsel %vm1313, %v1306, %v1310
  %v1315 = vand.u32 2147483647, %v1250
  %vm1316 = vcmp.eq.f32.partialorder %v1315, 8.507059e+37
  %v1317 = vand.u32 %v1250, 2147483648
  %v1318 = vor.u32 1.1754944e-38, %v1317
  %v1319 = vsel %vm1316, %v1318, %v1314
  %v1320 = vmul.f32 1.0, %v1319
  %v1321 = vrcp.pop %v1251
  %v1322 = vmul.f32 %v1251, %v1321
  %v1323 = vsub.f32 1.0, %v1322
  %v1324 = vmul.f32 %v1321, %v1323
  %v1325 = vadd.f32 %v1321, %v1324
  %vm1326 = vweird.f32 %v1251
  %vm1327 = vweird.f32 %v1321
  %vm1328 = vmor %vm1326, %vm1327
  %v1329 = vsel %vm1328, %v1321, %v1325
  %v1330 = vand.u32 2147483647, %v1251
  %vm1331 = vcmp.eq.f32.partialorder %v1330, 8.507059e+37
  %v1332 = vand.u32 %v1251, 2147483648
  %v1333 = vor.u32 1.1754944e-38, %v1332
  %v1334 = vsel %vm1331, %v1333, %v1329
  %v1335 = vmul.f32 1.0, %v1334
  %v1336 = vrcp.pop %v1252
  %v1337 = vmul.f32 %v1252, %v1336
  %v1338 = vsub.f32 1.0, %v1337
  %v1339 = vmul.f32 %v1336, %v1338
  %v1340 = vadd.f32 %v1336, %v1339
  %vm1341 = vweird.f32 %v1252
  %vm1342 = vweird.f32 %v1336
  %vm1343 = vmor %vm1341, %vm1342
  %v1344 = vsel %vm1343, %v1336, %v1340
  %v1345 = vand.u32 2147483647, %v1252
  %vm1346 = vcmp.eq.f32.partialorder %v1345, 8.507059e+37
  %v1347 = vand.u32 %v1252, 2147483648
  %v1348 = vor.u32 1.1754944e-38, %v1347
  %v1349 = vsel %vm1346, %v1348, %v1344
  %v1350 = vmul.f32 1.0, %v1349
  %v1351 = vrcp.pop %v1253
  %v1352 = vmul.f32 %v1253, %v1351
  %v1353 = vsub.f32 1.0, %v1352
  %v1354 = vmul.f32 %v1351, %v1353
  %v1355 = vadd.f32 %v1351, %v1354
  %vm1356 = vweird.f32 %v1253
  %vm1357 = vweird.f32 %v1351
  %vm1358 = vmor %vm1356, %vm1357
  %v1359 = vsel %vm1358, %v1351, %v1355
  %v1360 = vand.u32 2147483647, %v1253
  %vm1361 = vcmp.eq.f32.partialorder %v1360, 8.507059e+37
  %v1362 = vand.u32 %v1253, 2147483648
  %v1363 = vor.u32 1.1754944e-38, %v1362
  %v1364 = vsel %vm1361, %v1363, %v1359
  %v1365 = vmul.f32 1.0, %v1364
  %v1366 = vrcp.pop %v1254
  %v1367 = vmul.f32 %v1254, %v1366
  %v1368 = vsub.f32 1.0, %v1367
  %v1369 = vmul.f32 %v1366, %v1368
  %v1370 = vadd.f32 %v1366, %v1369
  %vm1371 = vweird.f32 %v1254
  %vm1372 = vweird.f32 %v1366
  %vm1373 = vmor %vm1371, %vm1372
  %v1374 = vsel %vm1373, %v1366, %v1370
  %v1375 = vand.u32 2147483647, %v1254
  %vm1376 = vcmp.eq.f32.partialorder %v1375, 8.507059e+37
  %v1377 = vand.u32 %v1254, 2147483648
  %v1378 = vor.u32 1.1754944e-38, %v1377
  %v1379 = vsel %vm1376, %v1378, %v1374
  %v1380 = vmul.f32 1.0, %v1379
  %v1381 = vrcp.pop %v1255
  %v1382 = vmul.f32 %v1255, %v1381
  %v1383 = vsub.f32 1.0, %v1382
  %v1384 = vmul.f32 %v1381, %v1383
  %v1385 = vadd.f32 %v1381, %v1384
  %vm1386 = vweird.f32 %v1255
  %vm1387 = vweird.f32 %v1381
  %vm1388 = vmor %vm1386, %vm1387
  %v1389 = vsel %vm1388, %v1381, %v1385
  %v1390 = vand.u32 2147483647, %v1255
  %vm1391 = vcmp.eq.f32.partialorder %v1390, 8.507059e+37
  %v1392 = vand.u32 %v1255, 2147483648
  %v1393 = vor.u32 1.1754944e-38, %v1392
  %v1394 = vsel %vm1391, %v1393, %v1389
  %v1395 = vmul.f32 1.0, %v1394
  %v1396 = vrcp.pop %v1256
  %v1397 = vmul.f32 %v1256, %v1396
  %v1398 = vsub.f32 1.0, %v1397
  %v1399 = vmul.f32 %v1396, %v1398
  %v1400 = vadd.f32 %v1396, %v1399
  %vm1401 = vweird.f32 %v1256
  %vm1402 = vweird.f32 %v1396
  %vm1403 = vmor %vm1401, %vm1402
  %v1404 = vsel %vm1403, %v1396, %v1400
  %v1405 = vand.u32 2147483647, %v1256
  %vm1406 = vcmp.eq.f32.partialorder %v1405, 8.507059e+37
  %v1407 = vand.u32 %v1256, 2147483648
  %v1408 = vor.u32 1.1754944e-38, %v1407
  %v1409 = vsel %vm1406, %v1408, %v1404
  %v1410 = vmul.f32 1.0, %v1409
  %v1411 = vrcp.pop %v1257
  %v1412 = vmul.f32 %v1257, %v1411
  %v1413 = vsub.f32 1.0, %v1412
  %v1414 = vmul.f32 %v1411, %v1413
  %v1415 = vadd.f32 %v1411, %v1414
  %vm1416 = vweird.f32 %v1257
  %vm1417 = vweird.f32 %v1411
  %vm1418 = vmor %vm1416, %vm1417
  %v1419 = vsel %vm1418, %v1411, %v1415
  %v1420 = vand.u32 2147483647, %v1257
  %vm1421 = vcmp.eq.f32.partialorder %v1420, 8.507059e+37
  %v1422 = vand.u32 %v1257, 2147483648
  %v1423 = vor.u32 1.1754944e-38, %v1422
  %v1424 = vsel %vm1421, %v1423, %v1419
  %v1425 = vmul.f32 1.0, %v1424
  %v1426 = vrcp.pop %v1258
  %v1427 = vmul.f32 %v1258, %v1426
  %v1428 = vsub.f32 1.0, %v1427
  %v1429 = vmul.f32 %v1426, %v1428
  %v1430 = vadd.f32 %v1426, %v1429
  %vm1431 = vweird.f32 %v1258
  %vm1432 = vweird.f32 %v1426
  %vm1433 = vmor %vm1431, %vm1432
  %v1434 = vsel %vm1433, %v1426, %v1430
  %v1435 = vand.u32 2147483647, %v1258
  %vm1436 = vcmp.eq.f32.partialorder %v1435, 8.507059e+37
  %v1437 = vand.u32 %v1258, 2147483648
  %v1438 = vor.u32 1.1754944e-38, %v1437
  %v1439 = vsel %vm1436, %v1438, %v1434
  %v1440 = vmul.f32 1.0, %v1439
  %v1441 = vrcp.pop %v1259
  %v1442 = vmul.f32 %v1259, %v1441
  %v1443 = vsub.f32 1.0, %v1442
  %v1444 = vmul.f32 %v1441, %v1443
  %v1445 = vadd.f32 %v1441, %v1444
  %vm1446 = vweird.f32 %v1259
  %vm1447 = vweird.f32 %v1441
  %vm1448 = vmor %vm1446, %vm1447
  %v1449 = vsel %vm1448, %v1441, %v1445
  %v1450 = vand.u32 2147483647, %v1259
  %vm1451 = vcmp.eq.f32.partialorder %v1450, 8.507059e+37
  %v1452 = vand.u32 %v1259, 2147483648
  %v1453 = vor.u32 1.1754944e-38, %v1452
  %v1454 = vsel %vm1451, %v1453, %v1449
  %v1455 = vmul.f32 1.0, %v1454
  %v1456 = vrcp.pop %v1260
  %v1457 = vmul.f32 %v1260, %v1456
  %v1458 = vsub.f32 1.0, %v1457
  %v1459 = vmul.f32 %v1456, %v1458
  %v1460 = vadd.f32 %v1456, %v1459
  %vm1461 = vweird.f32 %v1260
  %vm1462 = vweird.f32 %v1456
  %vm1463 = vmor %vm1461, %vm1462
  %v1464 = vsel %vm1463, %v1456, %v1460
  %v1465 = vand.u32 2147483647, %v1260
  %vm1466 = vcmp.eq.f32.partialorder %v1465, 8.507059e+37
  %v1467 = vand.u32 %v1260, 2147483648
  %v1468 = vor.u32 1.1754944e-38, %v1467
  %v1469 = vsel %vm1466, %v1468, %v1464
  %v1470 = vmul.f32 1.0, %v1469
  %1471 = vst [vmem:[%s13] sm:$0xff] %v1275
  %1472 = vst [vmem:[%s13 + $0x8] sm:$0xff] %v1290
  %1473 = vst [vmem:[%s13 + $0x10] sm:$0xff] %v1305
  %1474 = vst [vmem:[%s13 + $0x18] sm:$0xff] %v1320
  %1475 = vst [vmem:[%s13 + $0x20] sm:$0xff] %v1335
  %1476 = vst [vmem:[%s13 + $0x28] sm:$0xff] %v1350
  %1477 = vst.msk [vmem:[%s13 + $0x30] sm:$0xff] %vm462, %v1365
  %1478 = vst [vmem:[%s13 + $0x38] sm:$0xff] %v1380
  %1479 = vst [vmem:[%s13 + $0x40] sm:$0xff] %v1395
  %1480 = vst [vmem:[%s13 + $0x48] sm:$0xff] %v1410
  %1481 = vst [vmem:[%s13 + $0x50] sm:$0xff] %v1425
  %1482 = vst [vmem:[%s13 + $0x58] sm:$0xff] %v1440
  %1483 = vst [vmem:[%s13 + $0x60] sm:$0xff] %v1455
  %1484 = vst.msk [vmem:[%s13 + $0x68] sm:$0xff] %vm462, %v1470
  // Predicated region
  $region54: #{deep_autoencoder_forward.1} parent=0 // pred_check
    _
  $region55: #{deep_autoencoder_forward.1} parent=0 // pred_check_branch
    %1486 = sbr.rel (0) target = $region57
  $region56: #{deep_autoencoder_forward.1} parent=0 // pred_region
    _
  $region57: #{deep_autoencoder_forward.1} parent=0 // pred_fallthru
    _
  // Predicated region
  $region58: #{deep_autoencoder_forward.1} parent=0 // pred_check
    _
  $region59: #{deep_autoencoder_forward.1} parent=0 // pred_check_branch
    %1488 = sbr.rel (0) target = $region61
  $region60: #{deep_autoencoder_forward.1} parent=0 // pred_region
    _
  $region61: #{deep_autoencoder_forward.1} parent=0 // pred_fallthru
    _

</llo_original>
